<compile_context>
chip_gen: v7x
topology: tpu7x:2x2x1
jax: 0.10.0
libtpu: 0.0.40
codegen_flags: <defaults>
</compile_context>

<pallas_src>
import jax
import jax.numpy as jnp
from jax.experimental import pallas as pl
from jax.experimental.pallas import tpu as pltpu


def _lstm2_kernel(x_ref, wih0_ref, whh0_ref, b0_ref, w1_ref, b1_ref,
                  wfc_ref, bfc_ref, out_ref):
    """2-layer LSTM recurrence + final Linear(H, 1), all in one kernel.

    x_ref:   (B, T, F)   batch-first input (as the PyTorch module receives it)
    wih0_ref:(F, 4H)     layer-0 input weights          (gate order i,f,o,g)
    whh0_ref:(H, 4H)     layer-0 recurrent weights
    b0_ref:  (1, 4H)     layer-0 combined bias (b_ih + b_hh)
    w1_ref:  (2H, 4H)    layer-1 merged weights vstack([W_ih1, W_hh1])
    b1_ref:  (1, 4H)     layer-1 combined bias
    wfc_ref: (H, 1)      fc weight (transposed vs. torch)
    bfc_ref: (1, 1)      fc bias
    out_ref: (B, 1)      model output
    """
    B, T, _ = x_ref.shape
    H4 = whh0_ref.shape[1]
    H = H4 // 4
    H3 = 3 * H

    # Hoist weights / bias broadcasts out of the unrolled loop.
    wih0 = wih0_ref[...]
    whh0 = whh0_ref[...]
    w1 = w1_ref[...]
    b0 = jnp.broadcast_to(b0_ref[...], (B, H4))
    b1 = jnp.broadcast_to(b1_ref[...], (B, H4))

    def cell(gates, c):
        # Gate columns pre-permuted to [i, f, o, g]: one sigmoid over the first
        # 3H lanes, one tanh over the last H lanes (instead of both
        # transcendentals over the full 4H).
        sig = jax.nn.sigmoid(gates[:, :H3])
        i_g = sig[:, 0 * H:1 * H]
        f_g = sig[:, 1 * H:2 * H]
        o_g = sig[:, 2 * H:H3]
        g_g = jnp.tanh(gates[:, H3:])
        c_new = f_g * c + i_g * g_g
        h_new = o_g * jnp.tanh(c_new)
        return h_new, c_new

    zeros = jnp.zeros((B, H), jnp.float32)
    h0 = c0 = h1 = c1 = zeros

    # T is small and static: plain Python loop == fully unrolled, so the
    # scheduler can interleave MXU/EUP/VPU work across adjacent steps and hoist
    # the carry-independent x_t @ W_ih0 pushes off the serial chain.
    for t in range(T):
        x_t = x_ref[:, t, :]                                   # (B, F) static slice
        gates0 = (jnp.dot(x_t, wih0, preferred_element_type=jnp.float32)
                  + jnp.dot(h0, whh0, preferred_element_type=jnp.float32)
                  + b0)
        h0, c0 = cell(gates0, c0)

        # Layer 1: single merged K=2H matmul; concat([h0, h1]) is one
        # full-lane (B, 128) vreg slab.
        hcat = jnp.concatenate([h0, h1], axis=-1)              # (B, 2H)
        gates1 = jnp.dot(hcat, w1, preferred_element_type=jnp.float32) + b1
        h1, c1 = cell(gates1, c1)

    # Fused epilogue Linear(H, 1) on the last step's top-layer hidden state.
    out = jnp.dot(h1, wfc_ref[...], preferred_element_type=jnp.float32)
    out_ref[...] = out + bfc_ref[...]


@jax.jit
def lstm_model_forward(x_btf, kparams):
    """x_btf: (B, T, F) float32, batch_first like the PyTorch module."""
    B, _, _ = x_btf.shape
    vmem = pl.BlockSpec(memory_space=pltpu.MemorySpace.VMEM)
    return pl.pallas_call(
        _lstm2_kernel,
        out_shape=jax.ShapeDtypeStruct((B, 1), jnp.float32),
        in_specs=[vmem] * 8,
        out_specs=vmem,
    )(x_btf, kparams["wih0"], kparams["whh0"], kparams["b0"],
      kparams["w1"], kparams["b1"], kparams["wfc"], kparams["bfc"])


def init_params(key, input_size, hidden_size):
    """Deterministic uniform(-1/sqrt(H), 1/sqrt(H)) init, like nn.LSTM/Linear.

    Stored transposed vs. PyTorch: W_ih (F, 4H), W_hh (H, 4H); gate order is
    torch's [i, f, g, o]; biases are b_ih + b_hh combined.
    """
    H = hidden_size
    bound = 1.0 / (H ** 0.5)
    ks = jax.random.split(key, 11)

    def u(k, shape):
        return jax.random.uniform(k, shape, jnp.float32, -bound, bound)

    return {
        "wih0": u(ks[0], (input_size, 4 * H)),
        "whh0": u(ks[1], (H, 4 * H)),
        "b0": u(ks[2], (1, 4 * H)) + u(ks[3], (1, 4 * H)),
        "wih1": u(ks[4], (H, 4 * H)),
        "whh1": u(ks[5], (H, 4 * H)),
        "b1": u(ks[6], (1, 4 * H)) + u(ks[7], (1, 4 * H)),
        "wfc": u(ks[8], (H, 1)),
        "bfc": u(ks[9], (1, 1)),
    }


def prepare_kernel_params(params):
    """Offline weight prep for the kernel layout.

    * Permute gate columns [i, f, g, o] -> [i, f, o, g] (sigmoid block first).
    * Stack layer-1's input/recurrent weights into one (2H, 4H) matrix.
    """
    H = params["whh0"].shape[0]
    perm = jnp.concatenate([
        jnp.arange(0, 2 * H),          # i, f
        jnp.arange(3 * H, 4 * H),      # o
        jnp.arange(2 * H, 3 * H),      # g
    ])

    def p(w):
        return w[..., perm]

    return {
        "wih0": p(params["wih0"]),
        "whh0": p(params["whh0"]),
        "b0": p(params["b0"]),
        "w1": jnp.concatenate([p(params["wih1"]), p(params["whh1"])], axis=0),
        "b1": p(params["b1"]),
        "wfc": params["wfc"],
        "bfc": params["bfc"],
    }


def _reference_forward(x_btf, params):
    """Pure-JAX reference of the same math (torch gate order, unmerged dots)."""
    B, T, _ = x_btf.shape
    H = params["whh0"].shape[0]

    def cell(x_t, h, c, wih, whh, b):
        g = x_t @ wih + h @ whh + b
        i = jax.nn.sigmoid(g[:, 0 * H:1 * H])
        f = jax.nn.sigmoid(g[:, 1 * H:2 * H])
        gg = jnp.tanh(g[:, 2 * H:3 * H])
        o = jax.nn.sigmoid(g[:, 3 * H:4 * H])
        c = f * c + i * gg
        h = o * jnp.tanh(c)
        return h, c

    h0 = c0 = h1 = c1 = jnp.zeros((B, H), jnp.float32)
    for t in range(T):
        h0, c0 = cell(x_btf[:, t, :], h0, c0,
                      params["wih0"], params["whh0"], params["b0"])
        h1, c1 = cell(h0, h1, c1,
                      params["wih1"], params["whh1"], params["b1"])
    return h1 @ params["wfc"] + params["bfc"]


if __name__ == "__main__":
    # Small shapes consistent with the module: hidden_size=64, num_layers=2.
    B, T, F, H = 2, 8, 4, 64
    key = jax.random.PRNGKey(0)
    k_x, k_p = jax.random.split(key)

    x = jax.random.normal(k_x, (B, T, F), dtype=jnp.float32)
    params = init_params(k_p, input_size=F, hidden_size=H)
    kparams = prepare_kernel_params(params)

    out = jax.block_until_ready(lstm_model_forward(x, kparams))
    assert out.shape == (B, 1)

    ref = _reference_forward(x, params)
    assert jnp.allclose(out, ref, atol=1e-5, rtol=1e-5)

    print("KERNEL_OK")
</pallas_src>

<mosaic_0001>
module attributes {stable_mosaic.version = 11 : i64} {
  func.func @_lstm2_kernel(%arg0: memref<2x8x4xf32, #tpu.memory_space<vmem>>, %arg1: memref<4x256xf32, #tpu.memory_space<vmem>>, %arg2: memref<64x256xf32, #tpu.memory_space<vmem>>, %arg3: memref<1x256xf32, #tpu.memory_space<vmem>>, %arg4: memref<128x256xf32, #tpu.memory_space<vmem>>, %arg5: memref<1x256xf32, #tpu.memory_space<vmem>>, %arg6: memref<64x1xf32, #tpu.memory_space<vmem>>, %arg7: memref<1x1xf32, #tpu.memory_space<vmem>>, %arg8: memref<2x1xf32, #tpu.memory_space<vmem>>) attributes {dimension_semantics = [], scalar_prefetch = 0 : i64, scratch_operands = 0 : i64, tpu.core_type = #tpu.core_type<tc>} {
    %c0 = arith.constant 0 : index
    %c0_0 = arith.constant 0 : index
    %0 = vector.load %arg1[%c0, %c0_0] : memref<4x256xf32, #tpu.memory_space<vmem>>, vector<4x256xf32>
    %c0_1 = arith.constant 0 : index
    %c0_2 = arith.constant 0 : index
    %1 = vector.load %arg2[%c0_1, %c0_2] : memref<64x256xf32, #tpu.memory_space<vmem>>, vector<64x256xf32>
    %c0_3 = arith.constant 0 : index
    %c0_4 = arith.constant 0 : index
    %2 = vector.load %arg4[%c0_3, %c0_4] : memref<128x256xf32, #tpu.memory_space<vmem>>, vector<128x256xf32>
    %c0_5 = arith.constant 0 : index
    %c0_6 = arith.constant 0 : index
    %3 = vector.load %arg3[%c0_5, %c0_6] : memref<1x256xf32, #tpu.memory_space<vmem>>, vector<1x256xf32>
    %4 = vector.shape_cast %3 : vector<1x256xf32> to vector<1x256xf32>
    %5 = vector.broadcast %4 : vector<1x256xf32> to vector<2x256xf32>
    %c0_7 = arith.constant 0 : index
    %c0_8 = arith.constant 0 : index
    %6 = vector.load %arg5[%c0_7, %c0_8] : memref<1x256xf32, #tpu.memory_space<vmem>>, vector<1x256xf32>
    %7 = vector.shape_cast %6 : vector<1x256xf32> to vector<1x256xf32>
    %8 = vector.broadcast %7 : vector<1x256xf32> to vector<2x256xf32>
    %cst = arith.constant 0.000000e+00 : f32
    %9 = vector.broadcast %cst : f32 to vector<2x64xf32>
    %c0_9 = arith.constant 0 : index
    %c0_10 = arith.constant 0 : index
    %c0_11 = arith.constant 0 : index
    %10 = vector.load %arg0[%c0_9, %c0_10, %c0_11] : memref<2x8x4xf32, #tpu.memory_space<vmem>>, vector<2x1x4xf32>
    %11 = vector.shape_cast %10 : vector<2x1x4xf32> to vector<2x4xf32>
    %cst_12 = arith.constant dense<0.000000e+00> : vector<2x256xf32>
    %12 = tpu.matmul %11, %0, %cst_12 {dimension_numbers = #tpu.dot_dimension_numbers<[1], [0], [0], [1], [0, 0, 1, 1], [], []>} : vector<2x4xf32>, vector<4x256xf32>, vector<2x256xf32> -> vector<2x256xf32>
    %cst_13 = arith.constant dense<0.000000e+00> : vector<2x256xf32>
    %13 = tpu.matmul %9, %1, %cst_13 {dimension_numbers = #tpu.dot_dimension_numbers<[1], [0], [0], [1], [0, 0, 1, 1], [], []>} : vector<2x64xf32>, vector<64x256xf32>, vector<2x256xf32> -> vector<2x256xf32>
    %14 = arith.addf %12, %13 : vector<2x256xf32>
    %15 = arith.addf %14, %5 : vector<2x256xf32>
    %16 = vector.extract_strided_slice %15 {offsets = [0, 0], sizes = [2, 192], strides = [1, 1]} : vector<2x256xf32> to vector<2x192xf32>
    %17 = arith.negf %16 : vector<2x192xf32>
    %18 = math.exp %17 : vector<2x192xf32>
    %cst_14 = arith.constant 1.000000e+00 : f32
    %19 = vector.broadcast %cst_14 : f32 to vector<2x192xf32>
    %20 = arith.addf %19, %18 : vector<2x192xf32>
    %21 = arith.divf %19, %20 : vector<2x192xf32>
    %22 = vector.extract_strided_slice %21 {offsets = [0, 0], sizes = [2, 64], strides = [1, 1]} : vector<2x192xf32> to vector<2x64xf32>
    %23 = vector.extract_strided_slice %21 {offsets = [0, 64], sizes = [2, 64], strides = [1, 1]} : vector<2x192xf32> to vector<2x64xf32>
    %24 = vector.extract_strided_slice %21 {offsets = [0, 128], sizes = [2, 64], strides = [1, 1]} : vector<2x192xf32> to vector<2x64xf32>
    %25 = vector.extract_strided_slice %15 {offsets = [0, 192], sizes = [2, 64], strides = [1, 1]} : vector<2x256xf32> to vector<2x64xf32>
    %26 = math.tanh %25 : vector<2x64xf32>
    %27 = arith.mulf %23, %9 : vector<2x64xf32>
    %28 = arith.mulf %22, %26 : vector<2x64xf32>
    %29 = arith.addf %27, %28 : vector<2x64xf32>
    %30 = math.tanh %29 : vector<2x64xf32>
    %31 = arith.mulf %24, %30 : vector<2x64xf32>
    %32 = tpu.concatenate %31, %9 in 1 : vector<2x64xf32>, vector<2x64xf32> -> vector<2x128xf32>
    %cst_15 = arith.constant dense<0.000000e+00> : vector<2x256xf32>
    %33 = tpu.matmul %32, %2, %cst_15 {dimension_numbers = #tpu.dot_dimension_numbers<[1], [0], [0], [1], [0, 0, 1, 1], [], []>} : vector<2x128xf32>, vector<128x256xf32>, vector<2x256xf32> -> vector<2x256xf32>
    %34 = arith.addf %33, %8 : vector<2x256xf32>
    %35 = vector.extract_strided_slice %34 {offsets = [0, 0], sizes = [2, 192], strides = [1, 1]} : vector<2x256xf32> to vector<2x192xf32>
    %36 = arith.negf %35 : vector<2x192xf32>
    %37 = math.exp %36 : vector<2x192xf32>
    %cst_16 = arith.constant 1.000000e+00 : f32
    %38 = vector.broadcast %cst_16 : f32 to vector<2x192xf32>
    %39 = arith.addf %38, %37 : vector<2x192xf32>
    %40 = arith.divf %38, %39 : vector<2x192xf32>
    %41 = vector.extract_strided_slice %40 {offsets = [0, 0], sizes = [2, 64], strides = [1, 1]} : vector<2x192xf32> to vector<2x64xf32>
    %42 = vector.extract_strided_slice %40 {offsets = [0, 64], sizes = [2, 64], strides = [1, 1]} : vector<2x192xf32> to vector<2x64xf32>
    %43 = vector.extract_strided_slice %40 {offsets = [0, 128], sizes = [2, 64], strides = [1, 1]} : vector<2x192xf32> to vector<2x64xf32>
    %44 = vector.extract_strided_slice %34 {offsets = [0, 192], sizes = [2, 64], strides = [1, 1]} : vector<2x256xf32> to vector<2x64xf32>
    %45 = math.tanh %44 : vector<2x64xf32>
    %46 = arith.mulf %42, %9 : vector<2x64xf32>
    %47 = arith.mulf %41, %45 : vector<2x64xf32>
    %48 = arith.addf %46, %47 : vector<2x64xf32>
    %49 = math.tanh %48 : vector<2x64xf32>
    %50 = arith.mulf %43, %49 : vector<2x64xf32>
    %c0_17 = arith.constant 0 : index
    %c1 = arith.constant 1 : index
    %c0_18 = arith.constant 0 : index
    %51 = vector.load %arg0[%c0_17, %c1, %c0_18] : memref<2x8x4xf32, #tpu.memory_space<vmem>>, vector<2x1x4xf32>
    %52 = vector.shape_cast %51 : vector<2x1x4xf32> to vector<2x4xf32>
    %cst_19 = arith.constant dense<0.000000e+00> : vector<2x256xf32>
    %53 = tpu.matmul %52, %0, %cst_19 {dimension_numbers = #tpu.dot_dimension_numbers<[1], [0], [0], [1], [0, 0, 1, 1], [], []>} : vector<2x4xf32>, vector<4x256xf32>, vector<2x256xf32> -> vector<2x256xf32>
    %cst_20 = arith.constant dense<0.000000e+00> : vector<2x256xf32>
    %54 = tpu.matmul %31, %1, %cst_20 {dimension_numbers = #tpu.dot_dimension_numbers<[1], [0], [0], [1], [0, 0, 1, 1], [], []>} : vector<2x64xf32>, vector<64x256xf32>, vector<2x256xf32> -> vector<2x256xf32>
    %55 = arith.addf %53, %54 : vector<2x256xf32>
    %56 = arith.addf %55, %5 : vector<2x256xf32>
    %57 = vector.extract_strided_slice %56 {offsets = [0, 0], sizes = [2, 192], strides = [1, 1]} : vector<2x256xf32> to vector<2x192xf32>
    %58 = arith.negf %57 : vector<2x192xf32>
    %59 = math.exp %58 : vector<2x192xf32>
    %cst_21 = arith.constant 1.000000e+00 : f32
    %60 = vector.broadcast %cst_21 : f32 to vector<2x192xf32>
    %61 = arith.addf %60, %59 : vector<2x192xf32>
    %62 = arith.divf %60, %61 : vector<2x192xf32>
    %63 = vector.extract_strided_slice %62 {offsets = [0, 0], sizes = [2, 64], strides = [1, 1]} : vector<2x192xf32> to vector<2x64xf32>
    %64 = vector.extract_strided_slice %62 {offsets = [0, 64], sizes = [2, 64], strides = [1, 1]} : vector<2x192xf32> to vector<2x64xf32>
    %65 = vector.extract_strided_slice %62 {offsets = [0, 128], sizes = [2, 64], strides = [1, 1]} : vector<2x192xf32> to vector<2x64xf32>
    %66 = vector.extract_strided_slice %56 {offsets = [0, 192], sizes = [2, 64], strides = [1, 1]} : vector<2x256xf32> to vector<2x64xf32>
    %67 = math.tanh %66 : vector<2x64xf32>
    %68 = arith.mulf %64, %29 : vector<2x64xf32>
    %69 = arith.mulf %63, %67 : vector<2x64xf32>
    %70 = arith.addf %68, %69 : vector<2x64xf32>
    %71 = math.tanh %70 : vector<2x64xf32>
    %72 = arith.mulf %65, %71 : vector<2x64xf32>
    %73 = tpu.concatenate %72, %50 in 1 : vector<2x64xf32>, vector<2x64xf32> -> vector<2x128xf32>
    %cst_22 = arith.constant dense<0.000000e+00> : vector<2x256xf32>
    %74 = tpu.matmul %73, %2, %cst_22 {dimension_numbers = #tpu.dot_dimension_numbers<[1], [0], [0], [1], [0, 0, 1, 1], [], []>} : vector<2x128xf32>, vector<128x256xf32>, vector<2x256xf32> -> vector<2x256xf32>
    %75 = arith.addf %74, %8 : vector<2x256xf32>
    %76 = vector.extract_strided_slice %75 {offsets = [0, 0], sizes = [2, 192], strides = [1, 1]} : vector<2x256xf32> to vector<2x192xf32>
    %77 = arith.negf %76 : vector<2x192xf32>
    %78 = math.exp %77 : vector<2x192xf32>
    %cst_23 = arith.constant 1.000000e+00 : f32
    %79 = vector.broadcast %cst_23 : f32 to vector<2x192xf32>
    %80 = arith.addf %79, %78 : vector<2x192xf32>
    %81 = arith.divf %79, %80 : vector<2x192xf32>
    %82 = vector.extract_strided_slice %81 {offsets = [0, 0], sizes = [2, 64], strides = [1, 1]} : vector<2x192xf32> to vector<2x64xf32>
    %83 = vector.extract_strided_slice %81 {offsets = [0, 64], sizes = [2, 64], strides = [1, 1]} : vector<2x192xf32> to vector<2x64xf32>
    %84 = vector.extract_strided_slice %81 {offsets = [0, 128], sizes = [2, 64], strides = [1, 1]} : vector<2x192xf32> to vector<2x64xf32>
    %85 = vector.extract_strided_slice %75 {offsets = [0, 192], sizes = [2, 64], strides = [1, 1]} : vector<2x256xf32> to vector<2x64xf32>
    %86 = math.tanh %85 : vector<2x64xf32>
    %87 = arith.mulf %83, %48 : vector<2x64xf32>
    %88 = arith.mulf %82, %86 : vector<2x64xf32>
    %89 = arith.addf %87, %88 : vector<2x64xf32>
    %90 = math.tanh %89 : vector<2x64xf32>
    %91 = arith.mulf %84, %90 : vector<2x64xf32>
    %c0_24 = arith.constant 0 : index
    %c2 = arith.constant 2 : index
    %c0_25 = arith.constant 0 : index
    %92 = vector.load %arg0[%c0_24, %c2, %c0_25] : memref<2x8x4xf32, #tpu.memory_space<vmem>>, vector<2x1x4xf32>
    %93 = vector.shape_cast %92 : vector<2x1x4xf32> to vector<2x4xf32>
    %cst_26 = arith.constant dense<0.000000e+00> : vector<2x256xf32>
    %94 = tpu.matmul %93, %0, %cst_26 {dimension_numbers = #tpu.dot_dimension_numbers<[1], [0], [0], [1], [0, 0, 1, 1], [], []>} : vector<2x4xf32>, vector<4x256xf32>, vector<2x256xf32> -> vector<2x256xf32>
    %cst_27 = arith.constant dense<0.000000e+00> : vector<2x256xf32>
    %95 = tpu.matmul %72, %1, %cst_27 {dimension_numbers = #tpu.dot_dimension_numbers<[1], [0], [0], [1], [0, 0, 1, 1], [], []>} : vector<2x64xf32>, vector<64x256xf32>, vector<2x256xf32> -> vector<2x256xf32>
    %96 = arith.addf %94, %95 : vector<2x256xf32>
    %97 = arith.addf %96, %5 : vector<2x256xf32>
    %98 = vector.extract_strided_slice %97 {offsets = [0, 0], sizes = [2, 192], strides = [1, 1]} : vector<2x256xf32> to vector<2x192xf32>
    %99 = arith.negf %98 : vector<2x192xf32>
    %100 = math.exp %99 : vector<2x192xf32>
    %cst_28 = arith.constant 1.000000e+00 : f32
    %101 = vector.broadcast %cst_28 : f32 to vector<2x192xf32>
    %102 = arith.addf %101, %100 : vector<2x192xf32>
    %103 = arith.divf %101, %102 : vector<2x192xf32>
    %104 = vector.extract_strided_slice %103 {offsets = [0, 0], sizes = [2, 64], strides = [1, 1]} : vector<2x192xf32> to vector<2x64xf32>
    %105 = vector.extract_strided_slice %103 {offsets = [0, 64], sizes = [2, 64], strides = [1, 1]} : vector<2x192xf32> to vector<2x64xf32>
    %106 = vector.extract_strided_slice %103 {offsets = [0, 128], sizes = [2, 64], strides = [1, 1]} : vector<2x192xf32> to vector<2x64xf32>
    %107 = vector.extract_strided_slice %97 {offsets = [0, 192], sizes = [2, 64], strides = [1, 1]} : vector<2x256xf32> to vector<2x64xf32>
    %108 = math.tanh %107 : vector<2x64xf32>
    %109 = arith.mulf %105, %70 : vector<2x64xf32>
    %110 = arith.mulf %104, %108 : vector<2x64xf32>
    %111 = arith.addf %109, %110 : vector<2x64xf32>
    %112 = math.tanh %111 : vector<2x64xf32>
    %113 = arith.mulf %106, %112 : vector<2x64xf32>
    %114 = tpu.concatenate %113, %91 in 1 : vector<2x64xf32>, vector<2x64xf32> -> vector<2x128xf32>
    %cst_29 = arith.constant dense<0.000000e+00> : vector<2x256xf32>
    %115 = tpu.matmul %114, %2, %cst_29 {dimension_numbers = #tpu.dot_dimension_numbers<[1], [0], [0], [1], [0, 0, 1, 1], [], []>} : vector<2x128xf32>, vector<128x256xf32>, vector<2x256xf32> -> vector<2x256xf32>
    %116 = arith.addf %115, %8 : vector<2x256xf32>
    %117 = vector.extract_strided_slice %116 {offsets = [0, 0], sizes = [2, 192], strides = [1, 1]} : vector<2x256xf32> to vector<2x192xf32>
    %118 = arith.negf %117 : vector<2x192xf32>
    %119 = math.exp %118 : vector<2x192xf32>
    %cst_30 = arith.constant 1.000000e+00 : f32
    %120 = vector.broadcast %cst_30 : f32 to vector<2x192xf32>
    %121 = arith.addf %120, %119 : vector<2x192xf32>
    %122 = arith.divf %120, %121 : vector<2x192xf32>
    %123 = vector.extract_strided_slice %122 {offsets = [0, 0], sizes = [2, 64], strides = [1, 1]} : vector<2x192xf32> to vector<2x64xf32>
    %124 = vector.extract_strided_slice %122 {offsets = [0, 64], sizes = [2, 64], strides = [1, 1]} : vector<2x192xf32> to vector<2x64xf32>
    %125 = vector.extract_strided_slice %122 {offsets = [0, 128], sizes = [2, 64], strides = [1, 1]} : vector<2x192xf32> to vector<2x64xf32>
    %126 = vector.extract_strided_slice %116 {offsets = [0, 192], sizes = [2, 64], strides = [1, 1]} : vector<2x256xf32> to vector<2x64xf32>
    %127 = math.tanh %126 : vector<2x64xf32>
    %128 = arith.mulf %124, %89 : vector<2x64xf32>
    %129 = arith.mulf %123, %127 : vector<2x64xf32>
    %130 = arith.addf %128, %129 : vector<2x64xf32>
    %131 = math.tanh %130 : vector<2x64xf32>
    %132 = arith.mulf %125, %131 : vector<2x64xf32>
    %c0_31 = arith.constant 0 : index
    %c3 = arith.constant 3 : index
    %c0_32 = arith.constant 0 : index
    %133 = vector.load %arg0[%c0_31, %c3, %c0_32] : memref<2x8x4xf32, #tpu.memory_space<vmem>>, vector<2x1x4xf32>
    %134 = vector.shape_cast %133 : vector<2x1x4xf32> to vector<2x4xf32>
    %cst_33 = arith.constant dense<0.000000e+00> : vector<2x256xf32>
    %135 = tpu.matmul %134, %0, %cst_33 {dimension_numbers = #tpu.dot_dimension_numbers<[1], [0], [0], [1], [0, 0, 1, 1], [], []>} : vector<2x4xf32>, vector<4x256xf32>, vector<2x256xf32> -> vector<2x256xf32>
    %cst_34 = arith.constant dense<0.000000e+00> : vector<2x256xf32>
    %136 = tpu.matmul %113, %1, %cst_34 {dimension_numbers = #tpu.dot_dimension_numbers<[1], [0], [0], [1], [0, 0, 1, 1], [], []>} : vector<2x64xf32>, vector<64x256xf32>, vector<2x256xf32> -> vector<2x256xf32>
    %137 = arith.addf %135, %136 : vector<2x256xf32>
    %138 = arith.addf %137, %5 : vector<2x256xf32>
    %139 = vector.extract_strided_slice %138 {offsets = [0, 0], sizes = [2, 192], strides = [1, 1]} : vector<2x256xf32> to vector<2x192xf32>
    %140 = arith.negf %139 : vector<2x192xf32>
    %141 = math.exp %140 : vector<2x192xf32>
    %cst_35 = arith.constant 1.000000e+00 : f32
    %142 = vector.broadcast %cst_35 : f32 to vector<2x192xf32>
    %143 = arith.addf %142, %141 : vector<2x192xf32>
    %144 = arith.divf %142, %143 : vector<2x192xf32>
    %145 = vector.extract_strided_slice %144 {offsets = [0, 0], sizes = [2, 64], strides = [1, 1]} : vector<2x192xf32> to vector<2x64xf32>
    %146 = vector.extract_strided_slice %144 {offsets = [0, 64], sizes = [2, 64], strides = [1, 1]} : vector<2x192xf32> to vector<2x64xf32>
    %147 = vector.extract_strided_slice %144 {offsets = [0, 128], sizes = [2, 64], strides = [1, 1]} : vector<2x192xf32> to vector<2x64xf32>
    %148 = vector.extract_strided_slice %138 {offsets = [0, 192], sizes = [2, 64], strides = [1, 1]} : vector<2x256xf32> to vector<2x64xf32>
    %149 = math.tanh %148 : vector<2x64xf32>
    %150 = arith.mulf %146, %111 : vector<2x64xf32>
    %151 = arith.mulf %145, %149 : vector<2x64xf32>
    %152 = arith.addf %150, %151 : vector<2x64xf32>
    %153 = math.tanh %152 : vector<2x64xf32>
    %154 = arith.mulf %147, %153 : vector<2x64xf32>
    %155 = tpu.concatenate %154, %132 in 1 : vector<2x64xf32>, vector<2x64xf32> -> vector<2x128xf32>
    %cst_36 = arith.constant dense<0.000000e+00> : vector<2x256xf32>
    %156 = tpu.matmul %155, %2, %cst_36 {dimension_numbers = #tpu.dot_dimension_numbers<[1], [0], [0], [1], [0, 0, 1, 1], [], []>} : vector<2x128xf32>, vector<128x256xf32>, vector<2x256xf32> -> vector<2x256xf32>
    %157 = arith.addf %156, %8 : vector<2x256xf32>
    %158 = vector.extract_strided_slice %157 {offsets = [0, 0], sizes = [2, 192], strides = [1, 1]} : vector<2x256xf32> to vector<2x192xf32>
    %159 = arith.negf %158 : vector<2x192xf32>
    %160 = math.exp %159 : vector<2x192xf32>
    %cst_37 = arith.constant 1.000000e+00 : f32
    %161 = vector.broadcast %cst_37 : f32 to vector<2x192xf32>
    %162 = arith.addf %161, %160 : vector<2x192xf32>
    %163 = arith.divf %161, %162 : vector<2x192xf32>
    %164 = vector.extract_strided_slice %163 {offsets = [0, 0], sizes = [2, 64], strides = [1, 1]} : vector<2x192xf32> to vector<2x64xf32>
    %165 = vector.extract_strided_slice %163 {offsets = [0, 64], sizes = [2, 64], strides = [1, 1]} : vector<2x192xf32> to vector<2x64xf32>
    %166 = vector.extract_strided_slice %163 {offsets = [0, 128], sizes = [2, 64], strides = [1, 1]} : vector<2x192xf32> to vector<2x64xf32>
    %167 = vector.extract_strided_slice %157 {offsets = [0, 192], sizes = [2, 64], strides = [1, 1]} : vector<2x256xf32> to vector<2x64xf32>
    %168 = math.tanh %167 : vector<2x64xf32>
    %169 = arith.mulf %165, %130 : vector<2x64xf32>
    %170 = arith.mulf %164, %168 : vector<2x64xf32>
    %171 = arith.addf %169, %170 : vector<2x64xf32>
    %172 = math.tanh %171 : vector<2x64xf32>
    %173 = arith.mulf %166, %172 : vector<2x64xf32>
    %c0_38 = arith.constant 0 : index
    %c4 = arith.constant 4 : index
    %c0_39 = arith.constant 0 : index
    %174 = vector.load %arg0[%c0_38, %c4, %c0_39] : memref<2x8x4xf32, #tpu.memory_space<vmem>>, vector<2x1x4xf32>
    %175 = vector.shape_cast %174 : vector<2x1x4xf32> to vector<2x4xf32>
    %cst_40 = arith.constant dense<0.000000e+00> : vector<2x256xf32>
    %176 = tpu.matmul %175, %0, %cst_40 {dimension_numbers = #tpu.dot_dimension_numbers<[1], [0], [0], [1], [0, 0, 1, 1], [], []>} : vector<2x4xf32>, vector<4x256xf32>, vector<2x256xf32> -> vector<2x256xf32>
    %cst_41 = arith.constant dense<0.000000e+00> : vector<2x256xf32>
    %177 = tpu.matmul %154, %1, %cst_41 {dimension_numbers = #tpu.dot_dimension_numbers<[1], [0], [0], [1], [0, 0, 1, 1], [], []>} : vector<2x64xf32>, vector<64x256xf32>, vector<2x256xf32> -> vector<2x256xf32>
    %178 = arith.addf %176, %177 : vector<2x256xf32>
    %179 = arith.addf %178, %5 : vector<2x256xf32>
    %180 = vector.extract_strided_slice %179 {offsets = [0, 0], sizes = [2, 192], strides = [1, 1]} : vector<2x256xf32> to vector<2x192xf32>
    %181 = arith.negf %180 : vector<2x192xf32>
    %182 = math.exp %181 : vector<2x192xf32>
    %cst_42 = arith.constant 1.000000e+00 : f32
    %183 = vector.broadcast %cst_42 : f32 to vector<2x192xf32>
    %184 = arith.addf %183, %182 : vector<2x192xf32>
    %185 = arith.divf %183, %184 : vector<2x192xf32>
    %186 = vector.extract_strided_slice %185 {offsets = [0, 0], sizes = [2, 64], strides = [1, 1]} : vector<2x192xf32> to vector<2x64xf32>
    %187 = vector.extract_strided_slice %185 {offsets = [0, 64], sizes = [2, 64], strides = [1, 1]} : vector<2x192xf32> to vector<2x64xf32>
    %188 = vector.extract_strided_slice %185 {offsets = [0, 128], sizes = [2, 64], strides = [1, 1]} : vector<2x192xf32> to vector<2x64xf32>
    %189 = vector.extract_strided_slice %179 {offsets = [0, 192], sizes = [2, 64], strides = [1, 1]} : vector<2x256xf32> to vector<2x64xf32>
    %190 = math.tanh %189 : vector<2x64xf32>
    %191 = arith.mulf %187, %152 : vector<2x64xf32>
    %192 = arith.mulf %186, %190 : vector<2x64xf32>
    %193 = arith.addf %191, %192 : vector<2x64xf32>
    %194 = math.tanh %193 : vector<2x64xf32>
    %195 = arith.mulf %188, %194 : vector<2x64xf32>
    %196 = tpu.concatenate %195, %173 in 1 : vector<2x64xf32>, vector<2x64xf32> -> vector<2x128xf32>
    %cst_43 = arith.constant dense<0.000000e+00> : vector<2x256xf32>
    %197 = tpu.matmul %196, %2, %cst_43 {dimension_numbers = #tpu.dot_dimension_numbers<[1], [0], [0], [1], [0, 0, 1, 1], [], []>} : vector<2x128xf32>, vector<128x256xf32>, vector<2x256xf32> -> vector<2x256xf32>
    %198 = arith.addf %197, %8 : vector<2x256xf32>
    %199 = vector.extract_strided_slice %198 {offsets = [0, 0], sizes = [2, 192], strides = [1, 1]} : vector<2x256xf32> to vector<2x192xf32>
    %200 = arith.negf %199 : vector<2x192xf32>
    %201 = math.exp %200 : vector<2x192xf32>
    %cst_44 = arith.constant 1.000000e+00 : f32
    %202 = vector.broadcast %cst_44 : f32 to vector<2x192xf32>
    %203 = arith.addf %202, %201 : vector<2x192xf32>
    %204 = arith.divf %202, %203 : vector<2x192xf32>
    %205 = vector.extract_strided_slice %204 {offsets = [0, 0], sizes = [2, 64], strides = [1, 1]} : vector<2x192xf32> to vector<2x64xf32>
    %206 = vector.extract_strided_slice %204 {offsets = [0, 64], sizes = [2, 64], strides = [1, 1]} : vector<2x192xf32> to vector<2x64xf32>
    %207 = vector.extract_strided_slice %204 {offsets = [0, 128], sizes = [2, 64], strides = [1, 1]} : vector<2x192xf32> to vector<2x64xf32>
    %208 = vector.extract_strided_slice %198 {offsets = [0, 192], sizes = [2, 64], strides = [1, 1]} : vector<2x256xf32> to vector<2x64xf32>
    %209 = math.tanh %208 : vector<2x64xf32>
    %210 = arith.mulf %206, %171 : vector<2x64xf32>
    %211 = arith.mulf %205, %209 : vector<2x64xf32>
    %212 = arith.addf %210, %211 : vector<2x64xf32>
    %213 = math.tanh %212 : vector<2x64xf32>
    %214 = arith.mulf %207, %213 : vector<2x64xf32>
    %c0_45 = arith.constant 0 : index
    %c5 = arith.constant 5 : index
    %c0_46 = arith.constant 0 : index
    %215 = vector.load %arg0[%c0_45, %c5, %c0_46] : memref<2x8x4xf32, #tpu.memory_space<vmem>>, vector<2x1x4xf32>
    %216 = vector.shape_cast %215 : vector<2x1x4xf32> to vector<2x4xf32>
    %cst_47 = arith.constant dense<0.000000e+00> : vector<2x256xf32>
    %217 = tpu.matmul %216, %0, %cst_47 {dimension_numbers = #tpu.dot_dimension_numbers<[1], [0], [0], [1], [0, 0, 1, 1], [], []>} : vector<2x4xf32>, vector<4x256xf32>, vector<2x256xf32> -> vector<2x256xf32>
    %cst_48 = arith.constant dense<0.000000e+00> : vector<2x256xf32>
    %218 = tpu.matmul %195, %1, %cst_48 {dimension_numbers = #tpu.dot_dimension_numbers<[1], [0], [0], [1], [0, 0, 1, 1], [], []>} : vector<2x64xf32>, vector<64x256xf32>, vector<2x256xf32> -> vector<2x256xf32>
    %219 = arith.addf %217, %218 : vector<2x256xf32>
    %220 = arith.addf %219, %5 : vector<2x256xf32>
    %221 = vector.extract_strided_slice %220 {offsets = [0, 0], sizes = [2, 192], strides = [1, 1]} : vector<2x256xf32> to vector<2x192xf32>
    %222 = arith.negf %221 : vector<2x192xf32>
    %223 = math.exp %222 : vector<2x192xf32>
    %cst_49 = arith.constant 1.000000e+00 : f32
    %224 = vector.broadcast %cst_49 : f32 to vector<2x192xf32>
    %225 = arith.addf %224, %223 : vector<2x192xf32>
    %226 = arith.divf %224, %225 : vector<2x192xf32>
    %227 = vector.extract_strided_slice %226 {offsets = [0, 0], sizes = [2, 64], strides = [1, 1]} : vector<2x192xf32> to vector<2x64xf32>
    %228 = vector.extract_strided_slice %226 {offsets = [0, 64], sizes = [2, 64], strides = [1, 1]} : vector<2x192xf32> to vector<2x64xf32>
    %229 = vector.extract_strided_slice %226 {offsets = [0, 128], sizes = [2, 64], strides = [1, 1]} : vector<2x192xf32> to vector<2x64xf32>
    %230 = vector.extract_strided_slice %220 {offsets = [0, 192], sizes = [2, 64], strides = [1, 1]} : vector<2x256xf32> to vector<2x64xf32>
    %231 = math.tanh %230 : vector<2x64xf32>
    %232 = arith.mulf %228, %193 : vector<2x64xf32>
    %233 = arith.mulf %227, %231 : vector<2x64xf32>
    %234 = arith.addf %232, %233 : vector<2x64xf32>
    %235 = math.tanh %234 : vector<2x64xf32>
    %236 = arith.mulf %229, %235 : vector<2x64xf32>
    %237 = tpu.concatenate %236, %214 in 1 : vector<2x64xf32>, vector<2x64xf32> -> vector<2x128xf32>
    %cst_50 = arith.constant dense<0.000000e+00> : vector<2x256xf32>
    %238 = tpu.matmul %237, %2, %cst_50 {dimension_numbers = #tpu.dot_dimension_numbers<[1], [0], [0], [1], [0, 0, 1, 1], [], []>} : vector<2x128xf32>, vector<128x256xf32>, vector<2x256xf32> -> vector<2x256xf32>
    %239 = arith.addf %238, %8 : vector<2x256xf32>
    %240 = vector.extract_strided_slice %239 {offsets = [0, 0], sizes = [2, 192], strides = [1, 1]} : vector<2x256xf32> to vector<2x192xf32>
    %241 = arith.negf %240 : vector<2x192xf32>
    %242 = math.exp %241 : vector<2x192xf32>
    %cst_51 = arith.constant 1.000000e+00 : f32
    %243 = vector.broadcast %cst_51 : f32 to vector<2x192xf32>
    %244 = arith.addf %243, %242 : vector<2x192xf32>
    %245 = arith.divf %243, %244 : vector<2x192xf32>
    %246 = vector.extract_strided_slice %245 {offsets = [0, 0], sizes = [2, 64], strides = [1, 1]} : vector<2x192xf32> to vector<2x64xf32>
    %247 = vector.extract_strided_slice %245 {offsets = [0, 64], sizes = [2, 64], strides = [1, 1]} : vector<2x192xf32> to vector<2x64xf32>
    %248 = vector.extract_strided_slice %245 {offsets = [0, 128], sizes = [2, 64], strides = [1, 1]} : vector<2x192xf32> to vector<2x64xf32>
    %249 = vector.extract_strided_slice %239 {offsets = [0, 192], sizes = [2, 64], strides = [1, 1]} : vector<2x256xf32> to vector<2x64xf32>
    %250 = math.tanh %249 : vector<2x64xf32>
    %251 = arith.mulf %247, %212 : vector<2x64xf32>
    %252 = arith.mulf %246, %250 : vector<2x64xf32>
    %253 = arith.addf %251, %252 : vector<2x64xf32>
    %254 = math.tanh %253 : vector<2x64xf32>
    %255 = arith.mulf %248, %254 : vector<2x64xf32>
    %c0_52 = arith.constant 0 : index
    %c6 = arith.constant 6 : index
    %c0_53 = arith.constant 0 : index
    %256 = vector.load %arg0[%c0_52, %c6, %c0_53] : memref<2x8x4xf32, #tpu.memory_space<vmem>>, vector<2x1x4xf32>
    %257 = vector.shape_cast %256 : vector<2x1x4xf32> to vector<2x4xf32>
    %cst_54 = arith.constant dense<0.000000e+00> : vector<2x256xf32>
    %258 = tpu.matmul %257, %0, %cst_54 {dimension_numbers = #tpu.dot_dimension_numbers<[1], [0], [0], [1], [0, 0, 1, 1], [], []>} : vector<2x4xf32>, vector<4x256xf32>, vector<2x256xf32> -> vector<2x256xf32>
    %cst_55 = arith.constant dense<0.000000e+00> : vector<2x256xf32>
    %259 = tpu.matmul %236, %1, %cst_55 {dimension_numbers = #tpu.dot_dimension_numbers<[1], [0], [0], [1], [0, 0, 1, 1], [], []>} : vector<2x64xf32>, vector<64x256xf32>, vector<2x256xf32> -> vector<2x256xf32>
    %260 = arith.addf %258, %259 : vector<2x256xf32>
    %261 = arith.addf %260, %5 : vector<2x256xf32>
    %262 = vector.extract_strided_slice %261 {offsets = [0, 0], sizes = [2, 192], strides = [1, 1]} : vector<2x256xf32> to vector<2x192xf32>
    %263 = arith.negf %262 : vector<2x192xf32>
    %264 = math.exp %263 : vector<2x192xf32>
    %cst_56 = arith.constant 1.000000e+00 : f32
    %265 = vector.broadcast %cst_56 : f32 to vector<2x192xf32>
    %266 = arith.addf %265, %264 : vector<2x192xf32>
    %267 = arith.divf %265, %266 : vector<2x192xf32>
    %268 = vector.extract_strided_slice %267 {offsets = [0, 0], sizes = [2, 64], strides = [1, 1]} : vector<2x192xf32> to vector<2x64xf32>
    %269 = vector.extract_strided_slice %267 {offsets = [0, 64], sizes = [2, 64], strides = [1, 1]} : vector<2x192xf32> to vector<2x64xf32>
    %270 = vector.extract_strided_slice %267 {offsets = [0, 128], sizes = [2, 64], strides = [1, 1]} : vector<2x192xf32> to vector<2x64xf32>
    %271 = vector.extract_strided_slice %261 {offsets = [0, 192], sizes = [2, 64], strides = [1, 1]} : vector<2x256xf32> to vector<2x64xf32>
    %272 = math.tanh %271 : vector<2x64xf32>
    %273 = arith.mulf %269, %234 : vector<2x64xf32>
    %274 = arith.mulf %268, %272 : vector<2x64xf32>
    %275 = arith.addf %273, %274 : vector<2x64xf32>
    %276 = math.tanh %275 : vector<2x64xf32>
    %277 = arith.mulf %270, %276 : vector<2x64xf32>
    %278 = tpu.concatenate %277, %255 in 1 : vector<2x64xf32>, vector<2x64xf32> -> vector<2x128xf32>
    %cst_57 = arith.constant dense<0.000000e+00> : vector<2x256xf32>
    %279 = tpu.matmul %278, %2, %cst_57 {dimension_numbers = #tpu.dot_dimension_numbers<[1], [0], [0], [1], [0, 0, 1, 1], [], []>} : vector<2x128xf32>, vector<128x256xf32>, vector<2x256xf32> -> vector<2x256xf32>
    %280 = arith.addf %279, %8 : vector<2x256xf32>
    %281 = vector.extract_strided_slice %280 {offsets = [0, 0], sizes = [2, 192], strides = [1, 1]} : vector<2x256xf32> to vector<2x192xf32>
    %282 = arith.negf %281 : vector<2x192xf32>
    %283 = math.exp %282 : vector<2x192xf32>
    %cst_58 = arith.constant 1.000000e+00 : f32
    %284 = vector.broadcast %cst_58 : f32 to vector<2x192xf32>
    %285 = arith.addf %284, %283 : vector<2x192xf32>
    %286 = arith.divf %284, %285 : vector<2x192xf32>
    %287 = vector.extract_strided_slice %286 {offsets = [0, 0], sizes = [2, 64], strides = [1, 1]} : vector<2x192xf32> to vector<2x64xf32>
    %288 = vector.extract_strided_slice %286 {offsets = [0, 64], sizes = [2, 64], strides = [1, 1]} : vector<2x192xf32> to vector<2x64xf32>
    %289 = vector.extract_strided_slice %286 {offsets = [0, 128], sizes = [2, 64], strides = [1, 1]} : vector<2x192xf32> to vector<2x64xf32>
    %290 = vector.extract_strided_slice %280 {offsets = [0, 192], sizes = [2, 64], strides = [1, 1]} : vector<2x256xf32> to vector<2x64xf32>
    %291 = math.tanh %290 : vector<2x64xf32>
    %292 = arith.mulf %288, %253 : vector<2x64xf32>
    %293 = arith.mulf %287, %291 : vector<2x64xf32>
    %294 = arith.addf %292, %293 : vector<2x64xf32>
    %295 = math.tanh %294 : vector<2x64xf32>
    %296 = arith.mulf %289, %295 : vector<2x64xf32>
    %c0_59 = arith.constant 0 : index
    %c7 = arith.constant 7 : index
    %c0_60 = arith.constant 0 : index
    %297 = vector.load %arg0[%c0_59, %c7, %c0_60] : memref<2x8x4xf32, #tpu.memory_space<vmem>>, vector<2x1x4xf32>
    %298 = vector.shape_cast %297 : vector<2x1x4xf32> to vector<2x4xf32>
    %cst_61 = arith.constant dense<0.000000e+00> : vector<2x256xf32>
    %299 = tpu.matmul %298, %0, %cst_61 {dimension_numbers = #tpu.dot_dimension_numbers<[1], [0], [0], [1], [0, 0, 1, 1], [], []>} : vector<2x4xf32>, vector<4x256xf32>, vector<2x256xf32> -> vector<2x256xf32>
    %cst_62 = arith.constant dense<0.000000e+00> : vector<2x256xf32>
    %300 = tpu.matmul %277, %1, %cst_62 {dimension_numbers = #tpu.dot_dimension_numbers<[1], [0], [0], [1], [0, 0, 1, 1], [], []>} : vector<2x64xf32>, vector<64x256xf32>, vector<2x256xf32> -> vector<2x256xf32>
    %301 = arith.addf %299, %300 : vector<2x256xf32>
    %302 = arith.addf %301, %5 : vector<2x256xf32>
    %303 = vector.extract_strided_slice %302 {offsets = [0, 0], sizes = [2, 192], strides = [1, 1]} : vector<2x256xf32> to vector<2x192xf32>
    %304 = arith.negf %303 : vector<2x192xf32>
    %305 = math.exp %304 : vector<2x192xf32>
    %cst_63 = arith.constant 1.000000e+00 : f32
    %306 = vector.broadcast %cst_63 : f32 to vector<2x192xf32>
    %307 = arith.addf %306, %305 : vector<2x192xf32>
    %308 = arith.divf %306, %307 : vector<2x192xf32>
    %309 = vector.extract_strided_slice %308 {offsets = [0, 0], sizes = [2, 64], strides = [1, 1]} : vector<2x192xf32> to vector<2x64xf32>
    %310 = vector.extract_strided_slice %308 {offsets = [0, 64], sizes = [2, 64], strides = [1, 1]} : vector<2x192xf32> to vector<2x64xf32>
    %311 = vector.extract_strided_slice %308 {offsets = [0, 128], sizes = [2, 64], strides = [1, 1]} : vector<2x192xf32> to vector<2x64xf32>
    %312 = vector.extract_strided_slice %302 {offsets = [0, 192], sizes = [2, 64], strides = [1, 1]} : vector<2x256xf32> to vector<2x64xf32>
    %313 = math.tanh %312 : vector<2x64xf32>
    %314 = arith.mulf %310, %275 : vector<2x64xf32>
    %315 = arith.mulf %309, %313 : vector<2x64xf32>
    %316 = arith.addf %314, %315 : vector<2x64xf32>
    %317 = math.tanh %316 : vector<2x64xf32>
    %318 = arith.mulf %311, %317 : vector<2x64xf32>
    %319 = tpu.concatenate %318, %296 in 1 : vector<2x64xf32>, vector<2x64xf32> -> vector<2x128xf32>
    %cst_64 = arith.constant dense<0.000000e+00> : vector<2x256xf32>
    %320 = tpu.matmul %319, %2, %cst_64 {dimension_numbers = #tpu.dot_dimension_numbers<[1], [0], [0], [1], [0, 0, 1, 1], [], []>} : vector<2x128xf32>, vector<128x256xf32>, vector<2x256xf32> -> vector<2x256xf32>
    %321 = arith.addf %320, %8 : vector<2x256xf32>
    %322 = vector.extract_strided_slice %321 {offsets = [0, 0], sizes = [2, 192], strides = [1, 1]} : vector<2x256xf32> to vector<2x192xf32>
    %323 = arith.negf %322 : vector<2x192xf32>
    %324 = math.exp %323 : vector<2x192xf32>
    %cst_65 = arith.constant 1.000000e+00 : f32
    %325 = vector.broadcast %cst_65 : f32 to vector<2x192xf32>
    %326 = arith.addf %325, %324 : vector<2x192xf32>
    %327 = arith.divf %325, %326 : vector<2x192xf32>
    %328 = vector.extract_strided_slice %327 {offsets = [0, 0], sizes = [2, 64], strides = [1, 1]} : vector<2x192xf32> to vector<2x64xf32>
    %329 = vector.extract_strided_slice %327 {offsets = [0, 64], sizes = [2, 64], strides = [1, 1]} : vector<2x192xf32> to vector<2x64xf32>
    %330 = vector.extract_strided_slice %327 {offsets = [0, 128], sizes = [2, 64], strides = [1, 1]} : vector<2x192xf32> to vector<2x64xf32>
    %331 = vector.extract_strided_slice %321 {offsets = [0, 192], sizes = [2, 64], strides = [1, 1]} : vector<2x256xf32> to vector<2x64xf32>
    %332 = math.tanh %331 : vector<2x64xf32>
    %333 = arith.mulf %329, %294 : vector<2x64xf32>
    %334 = arith.mulf %328, %332 : vector<2x64xf32>
    %335 = arith.addf %333, %334 : vector<2x64xf32>
    %336 = math.tanh %335 : vector<2x64xf32>
    %337 = arith.mulf %330, %336 : vector<2x64xf32>
    %c0_66 = arith.constant 0 : index
    %c0_67 = arith.constant 0 : index
    %338 = vector.load %arg6[%c0_66, %c0_67] : memref<64x1xf32, #tpu.memory_space<vmem>>, vector<64x1xf32>
    %cst_68 = arith.constant dense<0.000000e+00> : vector<2x1xf32>
    %339 = tpu.matmul %337, %338, %cst_68 {dimension_numbers = #tpu.dot_dimension_numbers<[1], [0], [0], [1], [0, 0, 1, 1], [], []>} : vector<2x64xf32>, vector<64x1xf32>, vector<2x1xf32> -> vector<2x1xf32>
    %c0_69 = arith.constant 0 : index
    %c0_70 = arith.constant 0 : index
    %340 = vector.load %arg7[%c0_69, %c0_70] : memref<1x1xf32, #tpu.memory_space<vmem>>, vector<1x1xf32>
    %341 = vector.broadcast %340 : vector<1x1xf32> to vector<2x1xf32>
    %342 = arith.addf %339, %341 : vector<2x1xf32>
    %c0_71 = arith.constant 0 : index
    %c0_72 = arith.constant 0 : index
    %343 = vector.load %arg8[%c0_71, %c0_72] : memref<2x1xf32, #tpu.memory_space<vmem>>, vector<2x1xf32>
    tpu.vector_store %arg8[%c0_71, %c0_72], %342 {strides = array<i32>} : memref<2x1xf32, #tpu.memory_space<vmem>>, vector<2x1xf32>,
    return
  }
}

</mosaic_0001>

<llo_original>
// kernel: lstm_model_forward.1
$region0: #{lstm_model_forward.1}
  #allocation0 [shape = 'u32[]', space=smem, size = 0x4, offset = 0x4, fixed_abs, tag = 'smem constant byte address 0x4 - core index']
  #allocation1 [shape = 'u32[144,128]{1,0:T(1,128)}', space=vmem, size = 0x12000, scoped, tag = 'internal scratch']
  #allocation2 [shape = 'f32[1,1]{1,0:T(1,128)S(1)}', space=vmem, size = 0x200, scoped, tag = 'scoped memory for lstm_model_forward.1']
  %s0 = inlined_call_operand.vmem [shape: f32[2,8,4], index: 0, kind: input, shape index: {}]
  %s1 = inlined_call_operand.vmem [shape: f32[4,256], index: 1, kind: input, shape index: {}]
  %s2 = inlined_call_operand.hbm [shape: f32[64,256], index: 2, kind: input, shape index: {}]
  %s3 = inlined_call_operand.vmem [shape: f32[1,256], index: 3, kind: input, shape index: {}]
  %s4 = inlined_call_operand.hbm [shape: f32[128,256], index: 4, kind: input, shape index: {}]
  %s5 = inlined_call_operand.vmem [shape: f32[1,256], index: 5, kind: input, shape index: {}]
  %s6 = inlined_call_operand.vmem [shape: f32[64,1], index: 6, kind: input, shape index: {}]
  %s7 = inlined_call_operand.<no memory space> [shape: f32[1,1], index: 7, kind: input, shape index: {}]
  %s8 = inlined_call_operand.vmem [shape: f32[2,1], index: 8, kind: output, shape index: {}]
  %s9 = sld [smem:[#allocation0]]
  $region50: #{lstm_model_forward.1} parent=0
    _
  %s11 = ssub.s32 1, %s9
  %s12 = scalar_select 0, %s11, %s9
  %v13 = vstv %s7
  %14 = vst [vmem:[#allocation2] sm:$0x1] %v13
  $region1: #{lstm_model_forward.1} parent=0
    #allocation3 [shape = 'u8[65536]{0}', space=vmem, size = 0x10000, scoped, tag = 'input window, operand 2, single buffered']
    #allocation4 [shape = 's32[1]{0}', space=sflag, size = 0x4, scoped, tag = 'scoped memory for lstm_model_forward.1']
    #allocation5 [shape = 'u8[131072]{0}', space=vmem, size = 0x20000, scoped, tag = 'input window, operand 4, single buffered']
    #allocation6 [shape = 's32[1]{0}', space=sflag, size = 0x4, scoped, tag = 'scoped memory for lstm_model_forward.1']
    %15 = vsyncpa [#allocation4], 0
    %16 = vsyncpa [#allocation6], 0
    // Predicated region
    $region2: #{lstm_model_forward.1} parent=1 // pred_check
      _
    $region3: #{lstm_model_forward.1} parent=1 // pred_check_branch
      %18 = sbr.rel (0) target = $region5
    $region4: #{lstm_model_forward.1} parent=1 // pred_region
      _
    $region5: #{lstm_model_forward.1} parent=1 // pred_fallthru
      _
    // Predicated region
    $region6: #{lstm_model_forward.1} parent=1 // pred_check
      _
    $region7: #{lstm_model_forward.1} parent=1 // pred_check_branch
      %20 = sbr.rel (0) target = $region9
    $region8: #{lstm_model_forward.1} parent=1 // pred_region
      _
    $region9: #{lstm_model_forward.1} parent=1 // pred_fallthru
      _
    // Predicated region
    $region10: #{lstm_model_forward.1} parent=1 // pred_check
      _
    $region11: #{lstm_model_forward.1} parent=1 // pred_check_branch
      %22 = sbr.rel (0) target = $region13
    $region12: #{lstm_model_forward.1} parent=1 // pred_region
      %s24 = ssub.s32 2048, 2048
      %25 = vsyncadd [#allocation4], %s24
      %s26 = sshll.u32 [#allocation3], 4
      %s27 = int_to_ptr.vmem [resolvable:$true] %s26
      %32 = dma.hbm_to_vmem [thread:$0]  %s2, 2048, %s27, [#allocation4], 256, 256, 16
    $region13: #{lstm_model_forward.1} parent=1 // pred_fallthru
      _
    // Predicated region
    $region14: #{lstm_model_forward.1} parent=1 // pred_check
      _
    $region15: #{lstm_model_forward.1} parent=1 // pred_check_branch
      %34 = sbr.rel (0) target = $region17
    $region16: #{lstm_model_forward.1} parent=1 // pred_region
      _
    $region17: #{lstm_model_forward.1} parent=1 // pred_fallthru
      _
    // Predicated region
    $region18: #{lstm_model_forward.1} parent=1 // pred_check
      _
    $region19: #{lstm_model_forward.1} parent=1 // pred_check_branch
      %36 = sbr.rel (0) target = $region21
    $region20: #{lstm_model_forward.1} parent=1 // pred_region
      %s38 = ssub.s32 4096, 4096
      %39 = vsyncadd [#allocation6], %s38
      %s40 = sshll.u32 [#allocation5], 4
      %s41 = int_to_ptr.vmem [resolvable:$true] %s40
      %46 = dma.hbm_to_vmem [thread:$0]  %s4, 4096, %s41, [#allocation6], 256, 256, 16
    $region21: #{lstm_model_forward.1} parent=1 // pred_fallthru
      _
    // Predicated region
    $region22: #{lstm_model_forward.1} parent=1 // pred_check
      _
    $region23: #{lstm_model_forward.1} parent=1 // pred_check_branch
      %48 = sbr.rel (0) target = $region25
    $region24: #{lstm_model_forward.1} parent=1 // pred_region
      _
    $region25: #{lstm_model_forward.1} parent=1 // pred_fallthru
      _
    // Predicated region
    $region26: #{lstm_model_forward.1} parent=1 // pred_check
      _
    $region27: #{lstm_model_forward.1} parent=1 // pred_check_branch
      %50 = sbr.rel (0) target = $region29
    $region28: #{lstm_model_forward.1} parent=1 // pred_region
      _
    $region29: #{lstm_model_forward.1} parent=1 // pred_fallthru
      _
    // Predicated region
    $region30: #{lstm_model_forward.1} parent=1 // pred_check
      _
    $region31: #{lstm_model_forward.1} parent=1 // pred_check_branch
      %52 = sbr.rel (0) target = $region33
    $region32: #{lstm_model_forward.1} parent=1 // pred_region
      _
    $region33: #{lstm_model_forward.1} parent=1 // pred_fallthru
      _
    // Predicated region
    $region34: #{lstm_model_forward.1} parent=1 // pred_check
      _
    $region35: #{lstm_model_forward.1} parent=1 // pred_check_branch
      %54 = sbr.rel (0) target = $region37
    $region36: #{lstm_model_forward.1} parent=1 // pred_region
      %55 = dma.done [#allocation4], 2048
    $region37: #{lstm_model_forward.1} parent=1 // pred_fallthru
      _
    // Predicated region
    $region38: #{lstm_model_forward.1} parent=1 // pred_check
      _
    $region39: #{lstm_model_forward.1} parent=1 // pred_check_branch
      %57 = sbr.rel (0) target = $region41
    $region40: #{lstm_model_forward.1} parent=1 // pred_region
      %58 = dma.done [#allocation6], 4096
    $region41: #{lstm_model_forward.1} parent=1 // pred_fallthru
      _
    %v59 = vld [vmem:[%s1] sm:$0xff]
    %v60 = vld [vmem:[#allocation3] sm:$0xff]
    %v61 = vld [vmem:[#allocation3 + $0x8] sm:$0xff]
    %v62 = vld [vmem:[#allocation3 + $0x10] sm:$0xff]
    %v63 = vld [vmem:[#allocation3 + $0x18] sm:$0xff]
    %v64 = vld [vmem:[#allocation3 + $0x20] sm:$0xff]
    %v65 = vld [vmem:[#allocation3 + $0x28] sm:$0xff]
    %v66 = vld [vmem:[#allocation3 + $0x30] sm:$0xff]
    %v67 = vld [vmem:[#allocation3 + $0x38] sm:$0xff]
    %v68 = vld [vmem:[#allocation3 + $0x40] sm:$0xff]
    %v69 = vld [vmem:[#allocation3 + $0x48] sm:$0xff]
    %v70 = vld [vmem:[#allocation3 + $0x50] sm:$0xff]
    %v71 = vld [vmem:[#allocation3 + $0x58] sm:$0xff]
    %v72 = vld [vmem:[#allocation3 + $0x60] sm:$0xff]
    %v73 = vld [vmem:[#allocation3 + $0x68] sm:$0xff]
    %v74 = vld [vmem:[#allocation3 + $0x70] sm:$0xff]
    %v75 = vld [vmem:[#allocation3 + $0x78] sm:$0xff]
    %v76 = vld [vmem:[#allocation5] sm:$0xff]
    %v77 = vld [vmem:[#allocation5 + $0x8] sm:$0xff]
    %v78 = vld [vmem:[#allocation5 + $0x10] sm:$0xff]
    %v79 = vld [vmem:[#allocation5 + $0x18] sm:$0xff]
    %v80 = vld [vmem:[#allocation5 + $0x20] sm:$0xff]
    %v81 = vld [vmem:[#allocation5 + $0x28] sm:$0xff]
    %v82 = vld [vmem:[#allocation5 + $0x30] sm:$0xff]
    %v83 = vld [vmem:[#allocation5 + $0x38] sm:$0xff]
    %v84 = vld [vmem:[#allocation5 + $0x40] sm:$0xff]
    %v85 = vld [vmem:[#allocation5 + $0x48] sm:$0xff]
    %v86 = vld [vmem:[#allocation5 + $0x50] sm:$0xff]
    %v87 = vld [vmem:[#allocation5 + $0x58] sm:$0xff]
    %v88 = vld [vmem:[#allocation5 + $0x60] sm:$0xff]
    %v89 = vld [vmem:[#allocation5 + $0x68] sm:$0xff]
    %v90 = vld [vmem:[#allocation5 + $0x70] sm:$0xff]
    %v91 = vld [vmem:[#allocation5 + $0x78] sm:$0xff]
    %v92 = vld [vmem:[#allocation5 + $0x80] sm:$0xff]
    %v93 = vld [vmem:[#allocation5 + $0x88] sm:$0xff]
    %v94 = vld [vmem:[#allocation5 + $0x90] sm:$0xff]
    %v95 = vld [vmem:[#allocation5 + $0x98] sm:$0xff]
    %v96 = vld [vmem:[#allocation5 + $0xa0] sm:$0xff]
    %v97 = vld [vmem:[#allocation5 + $0xa8] sm:$0xff]
    %v98 = vld [vmem:[#allocation5 + $0xb0] sm:$0xff]
    %v99 = vld [vmem:[#allocation5 + $0xb8] sm:$0xff]
    %v100 = vld [vmem:[#allocation5 + $0xc0] sm:$0xff]
    %v101 = vld [vmem:[#allocation5 + $0xc8] sm:$0xff]
    %v102 = vld [vmem:[#allocation5 + $0xd0] sm:$0xff]
    %v103 = vld [vmem:[#allocation5 + $0xd8] sm:$0xff]
    %v104 = vld [vmem:[#allocation5 + $0xe0] sm:$0xff]
    %v105 = vld [vmem:[#allocation5 + $0xe8] sm:$0xff]
    %v106 = vld [vmem:[#allocation5 + $0xf0] sm:$0xff]
    %v107 = vld [vmem:[#allocation5 + $0xf8] sm:$0xff]
    %v108 = vld [vmem:[%s3] sm:$0x3]
    %v110 = vlaneseq
    %v111 = vshrl.u32 %v110, 7
    %v112 = vsub.s32 0, %v111
    %v113 = vrot.slane %v108, %v112
    %v114 = vlaneseq
    %v115 = vshrl.u32 %v114, 7
    %v116 = vsub.s32 1, %v115
    %v117 = vrot.slane %v108, %v116
    %v120 = vld [vmem:[%s5] sm:$0x3]
    %v122 = vlaneseq
    %v123 = vshrl.u32 %v122, 7
    %v124 = vsub.s32 0, %v123
    %v125 = vrot.slane %v120, %v124
    %v126 = vlaneseq
    %v127 = vshrl.u32 %v126, 7
    %v128 = vsub.s32 1, %v127
    %v129 = vrot.slane %v120, %v128
    %v132 = vld [vmem:[%s0] sm:$0x1]
    %v133 = vld [vmem:[%s0 + $0x8] sm:$0x1]
    %vm134 = vcmask 523264
    %v136 = vsel %vm134, 0.0, 0
    %138 = vmatprep.subr.mxu0 %v61
    %139 = vmatpush1.msra.mxu0 %v60
    %140 = vmatprep.subr.mxu0 %v63
    %141 = vmatpush1.msra.mxu0 %v62
    %142 = vmatprep.subr.mxu0 %v65
    %143 = vmatpush1.msra.mxu0 %v64
    %144 = vmatprep.subr.mxu0 %v67
    %145 = vmatpush1.msra.mxu0 %v66
    %146 = vmatprep.subr.mxu0 %v69
    %147 = vmatpush1.msra.mxu0 %v68
    %148 = vmatprep.subr.mxu0 %v71
    %149 = vmatpush1.msra.mxu0 %v70
    %150 = vmatprep.subr.mxu0 %v73
    %151 = vmatpush1.msra.mxu0 %v72
    %152 = vmatprep.subr.mxu0 %v75
    %153 = vmatpush1.msra.mxu0 %v74
    %154 = vmatprep.subr.mxu0 0.0
    %155 = vmatpush1.msra.mxu0 0.0
    %156 = vmatprep.subr.mxu0 0.0
    %157 = vmatpush1.msra.mxu0 0.0
    %158 = vmatprep.subr.mxu0 0.0
    %159 = vmatpush1.msra.mxu0 0.0
    %160 = vmatprep.subr.mxu0 0.0
    %161 = vmatpush1.msra.mxu0 0.0
    %162 = vmatprep.subr.mxu0 0.0
    %163 = vmatpush1.msra.mxu0 0.0
    %164 = vmatprep.subr.mxu0 0.0
    %165 = vmatpush1.msra.mxu0 0.0
    %166 = vmatprep.subr.mxu0 0.0
    %167 = vmatpush1.msra.mxu0 0.0
    %168 = vmatprep.subr.mxu0 0.0
    %169 = vmatpush1.msra.mxu0 0.0
    %170 = vmatprep.subr.mxu0 0.0
    %171 = vmatpush1.msra.mxu0 0.0
    %172 = vmatprep.subr.mxu0 0.0
    %173 = vmatpush1.msra.mxu0 0.0
    %174 = vmatprep.subr.mxu0 0.0
    %175 = vmatpush1.msra.mxu0 0.0
    %176 = vmatprep.subr.mxu0 0.0
    %177 = vmatpush1.msra.mxu0 0.0
    %178 = vmatprep.subr.mxu0 0.0
    %179 = vmatpush1.msra.mxu0 0.0
    %180 = vmatprep.subr.mxu0 0.0
    %181 = vmatpush1.msra.mxu0 0.0
    %182 = vmatprep.subr.mxu0 0.0
    %183 = vmatpush1.msra.mxu0 0.0
    %184 = vmatprep.subr.mxu0 0.0
    %185 = vmatpush1.msra.mxu0 0.0
    %186 = vmatprep.subr.mxu0 0.0
    %187 = vmatpush1.msra.mxu0 0.0
    %188 = vmatprep.subr.mxu0 0.0
    %189 = vmatpush1.msra.mxu0 0.0
    %190 = vmatprep.subr.mxu0 0.0
    %191 = vmatpush1.msra.mxu0 0.0
    %192 = vmatprep.subr.mxu0 0.0
    %193 = vmatpush1.msra.mxu0 0.0
    %194 = vmatprep.subr.mxu0 0.0
    %195 = vmatpush1.msra.mxu0 0.0
    %196 = vmatprep.subr.mxu0 0.0
    %197 = vmatpush1.msra.mxu0 0.0
    %198 = vmatprep.subr.mxu0 0.0
    %199 = vmatpush1.msra.mxu0 0.0
    %200 = vmatprep.subr.mxu0 0.0
    %201 = vmatpush1.msra.mxu0 0.0
    %202 = vmatprep.mubr.f32.mxu0 0.0
    %203 = vmatmul.mubr.f32.gmra.mrb[0].mxu0 %v136
    %v204 = vpop.f32.mrb[0].mxu0
    %v205 = vadd.f32 0.0, %v204
    %v206 = vpop.f32.mrb[0].mxu0
    %v207 = vadd.f32 0.0, %v206
    %208 = vdwg.mxu0
    %v211 = vrot.slane %v133, 7
    %vm212 = vcmask 1041409
    %v213 = vsel %vm212, %v211, %v132
    %v215 = vcombine.high %v59, %v59
    %vm216 = vcmask 31744
    %v217 = vsel %vm216, %v213, 0
    %vm219 = vcmask 1043456
    %v220 = vsel %vm219, %v59, 0
    %v222 = vsel %vm219, %v215, 0
    %224 = vmatprep.subr.mxu0 %v222
    %225 = vmatpush1.msra.mxu0 %v220
    %226 = vmatprep.subr.mxu0 0.0
    %227 = vmatpush1.msra.mxu0 0.0
    %228 = vmatprep.subr.mxu0 0.0
    %229 = vmatpush1.msra.mxu0 0.0
    %230 = vmatprep.subr.mxu0 0.0
    %231 = vmatpush1.msra.mxu0 0.0
    %232 = vmatprep.subr.mxu0 0.0
    %233 = vmatpush1.msra.mxu0 0.0
    %234 = vmatprep.subr.mxu0 0.0
    %235 = vmatpush1.msra.mxu0 0.0
    %236 = vmatprep.subr.mxu0 0.0
    %237 = vmatpush1.msra.mxu0 0.0
    %238 = vmatprep.subr.mxu0 0.0
    %239 = vmatpush1.msra.mxu0 0.0
    %240 = vmatprep.subr.mxu0 0.0
    %241 = vmatpush1.msra.mxu0 0.0
    %242 = vmatprep.subr.mxu0 0.0
    %243 = vmatpush1.msra.mxu0 0.0
    %244 = vmatprep.subr.mxu0 0.0
    %245 = vmatpush1.msra.mxu0 0.0
    %246 = vmatprep.subr.mxu0 0.0
    %247 = vmatpush1.msra.mxu0 0.0
    %248 = vmatprep.subr.mxu0 0.0
    %249 = vmatpush1.msra.mxu0 0.0
    %250 = vmatprep.subr.mxu0 0.0
    %251 = vmatpush1.msra.mxu0 0.0
    %252 = vmatprep.subr.mxu0 0.0
    %253 = vmatpush1.msra.mxu0 0.0
    %254 = vmatprep.subr.mxu0 0.0
    %255 = vmatpush1.msra.mxu0 0.0
    %256 = vmatprep.subr.mxu0 0.0
    %257 = vmatpush1.msra.mxu0 0.0
    %258 = vmatprep.subr.mxu0 0.0
    %259 = vmatpush1.msra.mxu0 0.0
    %260 = vmatprep.subr.mxu0 0.0
    %261 = vmatpush1.msra.mxu0 0.0
    %262 = vmatprep.subr.mxu0 0.0
    %263 = vmatpush1.msra.mxu0 0.0
    %264 = vmatprep.subr.mxu0 0.0
    %265 = vmatpush1.msra.mxu0 0.0
    %266 = vmatprep.subr.mxu0 0.0
    %267 = vmatpush1.msra.mxu0 0.0
    %268 = vmatprep.subr.mxu0 0.0
    %269 = vmatpush1.msra.mxu0 0.0
    %270 = vmatprep.subr.mxu0 0.0
    %271 = vmatpush1.msra.mxu0 0.0
    %272 = vmatprep.subr.mxu0 0.0
    %273 = vmatpush1.msra.mxu0 0.0
    %274 = vmatprep.subr.mxu0 0.0
    %275 = vmatpush1.msra.mxu0 0.0
    %276 = vmatprep.subr.mxu0 0.0
    %277 = vmatpush1.msra.mxu0 0.0
    %278 = vmatprep.subr.mxu0 0.0
    %279 = vmatpush1.msra.mxu0 0.0
    %280 = vmatprep.subr.mxu0 0.0
    %281 = vmatpush1.msra.mxu0 0.0
    %282 = vmatprep.subr.mxu0 0.0
    %283 = vmatpush1.msra.mxu0 0.0
    %284 = vmatprep.subr.mxu0 0.0
    %285 = vmatpush1.msra.mxu0 0.0
    %286 = vmatprep.subr.mxu0 0.0
    %287 = vmatpush1.msra.mxu0 0.0
    %288 = vmatprep.mubr.f32.mxu0 0.0
    %289 = vmatmul.mubr.f32.gmra.mrb[0].mxu0 %v217
    %v290 = vpop.f32.mrb[0].mxu0
    %v291 = vadd.f32 %v205, %v290
    %v292 = vpop.f32.mrb[0].mxu0
    %v293 = vadd.f32 %v207, %v292
    %294 = vdwg.mxu0
    %v295 = vadd.f32 %v291, %v113
    %v296 = vadd.f32 %v293, %v117
    %v297 = vxor.u32 %v295, 2147483648
    %v298 = vxor.u32 %v296, 2147483648
    %v299 = vmul.f32 %v297, 1.442695
    %v300 = vpow.pop %v299
    %v301 = vmul.f32 %v298, 1.442695
    %v302 = vpow.pop %v301
    %v303 = vadd.f32 %v300, 1.0
    %v304 = vadd.f32 %v302, 1.0
    %v305 = vrcp.pop %v303
    %v306 = vmul.f32 1.0, %v305
    %v307 = vrcp.pop %v304
    %v308 = vmul.f32 1.0, %v307
    %v309 = vtanh.pop %v296
    %v310 = vmul.f32 %v306, 0.0
    %312 = vrot.lane.b32.xlu0 %v309, 64
    %v313 = vpop.permute.xlu0 %312
    %v315 = vmul.f32 %v306, %v313
    %317 = vrot.lane.b32.xlu0 %v315, 64
    %v318 = vpop.permute.xlu0 %317
    %v320 = vadd.f32 %v310, %v318
    %v321 = vtanh.pop %v320
    %323 = vrot.lane.b32.xlu0 %v321, 64
    %v324 = vpop.permute.xlu0 %323
    %v326 = vmul.f32 %v308, %v324
    %v327 = vsel %vm134, %v326, 0.0
    %328 = vmatprep.subr.mxu0 %v77
    %329 = vmatpush1.msra.mxu0 %v76
    %330 = vmatprep.subr.mxu0 %v79
    %331 = vmatpush1.msra.mxu0 %v78
    %332 = vmatprep.subr.mxu0 %v81
    %333 = vmatpush1.msra.mxu0 %v80
    %334 = vmatprep.subr.mxu0 %v83
    %335 = vmatpush1.msra.mxu0 %v82
    %336 = vmatprep.subr.mxu0 %v85
    %337 = vmatpush1.msra.mxu0 %v84
    %338 = vmatprep.subr.mxu0 %v87
    %339 = vmatpush1.msra.mxu0 %v86
    %340 = vmatprep.subr.mxu0 %v89
    %341 = vmatpush1.msra.mxu0 %v88
    %342 = vmatprep.subr.mxu0 %v91
    %343 = vmatpush1.msra.mxu0 %v90
    %344 = vmatprep.subr.mxu0 %v93
    %345 = vmatpush1.msra.mxu0 %v92
    %346 = vmatprep.subr.mxu0 %v95
    %347 = vmatpush1.msra.mxu0 %v94
    %348 = vmatprep.subr.mxu0 %v97
    %349 = vmatpush1.msra.mxu0 %v96
    %350 = vmatprep.subr.mxu0 %v99
    %351 = vmatpush1.msra.mxu0 %v98
    %352 = vmatprep.subr.mxu0 %v101
    %353 = vmatpush1.msra.mxu0 %v100
    %354 = vmatprep.subr.mxu0 %v103
    %355 = vmatpush1.msra.mxu0 %v102
    %356 = vmatprep.subr.mxu0 %v105
    %357 = vmatpush1.msra.mxu0 %v104
    %358 = vmatprep.subr.mxu0 %v107
    %359 = vmatpush1.msra.mxu0 %v106
    %360 = vmatprep.subr.mxu0 0.0
    %361 = vmatpush1.msra.mxu0 0.0
    %362 = vmatprep.subr.mxu0 0.0
    %363 = vmatpush1.msra.mxu0 0.0
    %364 = vmatprep.subr.mxu0 0.0
    %365 = vmatpush1.msra.mxu0 0.0
    %366 = vmatprep.subr.mxu0 0.0
    %367 = vmatpush1.msra.mxu0 0.0
    %368 = vmatprep.subr.mxu0 0.0
    %369 = vmatpush1.msra.mxu0 0.0
    %370 = vmatprep.subr.mxu0 0.0
    %371 = vmatpush1.msra.mxu0 0.0
    %372 = vmatprep.subr.mxu0 0.0
    %373 = vmatpush1.msra.mxu0 0.0
    %374 = vmatprep.subr.mxu0 0.0
    %375 = vmatpush1.msra.mxu0 0.0
    %376 = vmatprep.subr.mxu0 0.0
    %377 = vmatpush1.msra.mxu0 0.0
    %378 = vmatprep.subr.mxu0 0.0
    %379 = vmatpush1.msra.mxu0 0.0
    %380 = vmatprep.subr.mxu0 0.0
    %381 = vmatpush1.msra.mxu0 0.0
    %382 = vmatprep.subr.mxu0 0.0
    %383 = vmatpush1.msra.mxu0 0.0
    %384 = vmatprep.subr.mxu0 0.0
    %385 = vmatpush1.msra.mxu0 0.0
    %386 = vmatprep.subr.mxu0 0.0
    %387 = vmatpush1.msra.mxu0 0.0
    %388 = vmatprep.subr.mxu0 0.0
    %389 = vmatpush1.msra.mxu0 0.0
    %390 = vmatprep.subr.mxu0 0.0
    %391 = vmatpush1.msra.mxu0 0.0
    %392 = vmatprep.mubr.f32.mxu0 0.0
    %393 = vmatmul.mubr.f32.gmra.mrb[0].mxu0 %v327
    %v394 = vpop.f32.mrb[0].mxu0
    %v395 = vadd.f32 %v125, %v394
    %v396 = vpop.f32.mrb[0].mxu0
    %v397 = vadd.f32 %v129, %v396
    %398 = vdwg.mxu0
    %v399 = vxor.u32 %v395, 2147483648
    %v400 = vxor.u32 %v397, 2147483648
    %v401 = vmul.f32 %v399, 1.442695
    %v402 = vpow.pop %v401
    %v403 = vmul.f32 %v400, 1.442695
    %v404 = vpow.pop %v403
    %v405 = vadd.f32 %v402, 1.0
    %v406 = vadd.f32 %v404, 1.0
    %v407 = vrcp.pop %v405
    %v408 = vmul.f32 1.0, %v407
    %v409 = vrcp.pop %v406
    %v410 = vmul.f32 1.0, %v409
    %v411 = vtanh.pop %v397
    %v412 = vmul.f32 %v408, 0.0
    %414 = vrot.lane.b32.xlu0 %v411, 64
    %v415 = vpop.permute.xlu0 %414
    %v417 = vmul.f32 %v408, %v415
    %419 = vrot.lane.b32.xlu0 %v417, 64
    %v420 = vpop.permute.xlu0 %419
    %v422 = vadd.f32 %v412, %v420
    %v423 = vtanh.pop %v422
    %425 = vrot.lane.b32.xlu0 %v423, 64
    %v426 = vpop.permute.xlu0 %425
    %v428 = vmul.f32 %v410, %v426
    %v429 = vld [vmem:[%s0 + $0x1] sm:$0x1]
    %v430 = vld [vmem:[%s0 + $0x9] sm:$0x1]
    %v432 = vsel %vm134, %v326, 0
    %434 = vmatprep.subr.mxu0 %v61
    %435 = vmatpush1.msra.mxu0 %v60
    %436 = vmatprep.subr.mxu0 %v63
    %437 = vmatpush1.msra.mxu0 %v62
    %438 = vmatprep.subr.mxu0 %v65
    %439 = vmatpush1.msra.mxu0 %v64
    %440 = vmatprep.subr.mxu0 %v67
    %441 = vmatpush1.msra.mxu0 %v66
    %442 = vmatprep.subr.mxu0 %v69
    %443 = vmatpush1.msra.mxu0 %v68
    %444 = vmatprep.subr.mxu0 %v71
    %445 = vmatpush1.msra.mxu0 %v70
    %446 = vmatprep.subr.mxu0 %v73
    %447 = vmatpush1.msra.mxu0 %v72
    %448 = vmatprep.subr.mxu0 %v75
    %449 = vmatpush1.msra.mxu0 %v74
    %450 = vmatprep.subr.mxu0 0.0
    %451 = vmatpush1.msra.mxu0 0.0
    %452 = vmatprep.subr.mxu0 0.0
    %453 = vmatpush1.msra.mxu0 0.0
    %454 = vmatprep.subr.mxu0 0.0
    %455 = vmatpush1.msra.mxu0 0.0
    %456 = vmatprep.subr.mxu0 0.0
    %457 = vmatpush1.msra.mxu0 0.0
    %458 = vmatprep.subr.mxu0 0.0
    %459 = vmatpush1.msra.mxu0 0.0
    %460 = vmatprep.subr.mxu0 0.0
    %461 = vmatpush1.msra.mxu0 0.0
    %462 = vmatprep.subr.mxu0 0.0
    %463 = vmatpush1.msra.mxu0 0.0
    %464 = vmatprep.subr.mxu0 0.0
    %465 = vmatpush1.msra.mxu0 0.0
    %466 = vmatprep.subr.mxu0 0.0
    %467 = vmatpush1.msra.mxu0 0.0
    %468 = vmatprep.subr.mxu0 0.0
    %469 = vmatpush1.msra.mxu0 0.0
    %470 = vmatprep.subr.mxu0 0.0
    %471 = vmatpush1.msra.mxu0 0.0
    %472 = vmatprep.subr.mxu0 0.0
    %473 = vmatpush1.msra.mxu0 0.0
    %474 = vmatprep.subr.mxu0 0.0
    %475 = vmatpush1.msra.mxu0 0.0
    %476 = vmatprep.subr.mxu0 0.0
    %477 = vmatpush1.msra.mxu0 0.0
    %478 = vmatprep.subr.mxu0 0.0
    %479 = vmatpush1.msra.mxu0 0.0
    %480 = vmatprep.subr.mxu0 0.0
    %481 = vmatpush1.msra.mxu0 0.0
    %482 = vmatprep.subr.mxu0 0.0
    %483 = vmatpush1.msra.mxu0 0.0
    %484 = vmatprep.subr.mxu0 0.0
    %485 = vmatpush1.msra.mxu0 0.0
    %486 = vmatprep.subr.mxu0 0.0
    %487 = vmatpush1.msra.mxu0 0.0
    %488 = vmatprep.subr.mxu0 0.0
    %489 = vmatpush1.msra.mxu0 0.0
    %490 = vmatprep.subr.mxu0 0.0
    %491 = vmatpush1.msra.mxu0 0.0
    %492 = vmatprep.subr.mxu0 0.0
    %493 = vmatpush1.msra.mxu0 0.0
    %494 = vmatprep.subr.mxu0 0.0
    %495 = vmatpush1.msra.mxu0 0.0
    %496 = vmatprep.subr.mxu0 0.0
    %497 = vmatpush1.msra.mxu0 0.0
    %498 = vmatprep.mubr.f32.mxu0 0.0
    %499 = vmatmul.mubr.f32.gmra.mrb[0].mxu0 %v432
    %v500 = vpop.f32.mrb[0].mxu0
    %v501 = vadd.f32 0.0, %v500
    %v502 = vpop.f32.mrb[0].mxu0
    %v503 = vadd.f32 0.0, %v502
    %504 = vdwg.mxu0
    %v507 = vrot.slane %v430, 7
    %v508 = vsel %vm212, %v507, %v429
    %v509 = vsel %vm216, %v508, 0
    %511 = vmatprep.subr.mxu0 %v222
    %512 = vmatpush1.msra.mxu0 %v220
    %513 = vmatprep.subr.mxu0 0.0
    %514 = vmatpush1.msra.mxu0 0.0
    %515 = vmatprep.subr.mxu0 0.0
    %516 = vmatpush1.msra.mxu0 0.0
    %517 = vmatprep.subr.mxu0 0.0
    %518 = vmatpush1.msra.mxu0 0.0
    %519 = vmatprep.subr.mxu0 0.0
    %520 = vmatpush1.msra.mxu0 0.0
    %521 = vmatprep.subr.mxu0 0.0
    %522 = vmatpush1.msra.mxu0 0.0
    %523 = vmatprep.subr.mxu0 0.0
    %524 = vmatpush1.msra.mxu0 0.0
    %525 = vmatprep.subr.mxu0 0.0
    %526 = vmatpush1.msra.mxu0 0.0
    %527 = vmatprep.subr.mxu0 0.0
    %528 = vmatpush1.msra.mxu0 0.0
    %529 = vmatprep.subr.mxu0 0.0
    %530 = vmatpush1.msra.mxu0 0.0
    %531 = vmatprep.subr.mxu0 0.0
    %532 = vmatpush1.msra.mxu0 0.0
    %533 = vmatprep.subr.mxu0 0.0
    %534 = vmatpush1.msra.mxu0 0.0
    %535 = vmatprep.subr.mxu0 0.0
    %536 = vmatpush1.msra.mxu0 0.0
    %537 = vmatprep.subr.mxu0 0.0
    %538 = vmatpush1.msra.mxu0 0.0
    %539 = vmatprep.subr.mxu0 0.0
    %540 = vmatpush1.msra.mxu0 0.0
    %541 = vmatprep.subr.mxu0 0.0
    %542 = vmatpush1.msra.mxu0 0.0
    %543 = vmatprep.subr.mxu0 0.0
    %544 = vmatpush1.msra.mxu0 0.0
    %545 = vmatprep.subr.mxu0 0.0
    %546 = vmatpush1.msra.mxu0 0.0
    %547 = vmatprep.subr.mxu0 0.0
    %548 = vmatpush1.msra.mxu0 0.0
    %549 = vmatprep.subr.mxu0 0.0
    %550 = vmatpush1.msra.mxu0 0.0
    %551 = vmatprep.subr.mxu0 0.0
    %552 = vmatpush1.msra.mxu0 0.0
    %553 = vmatprep.subr.mxu0 0.0
    %554 = vmatpush1.msra.mxu0 0.0
    %555 = vmatprep.subr.mxu0 0.0
    %556 = vmatpush1.msra.mxu0 0.0
    %557 = vmatprep.subr.mxu0 0.0
    %558 = vmatpush1.msra.mxu0 0.0
    %559 = vmatprep.subr.mxu0 0.0
    %560 = vmatpush1.msra.mxu0 0.0
    %561 = vmatprep.subr.mxu0 0.0
    %562 = vmatpush1.msra.mxu0 0.0
    %563 = vmatprep.subr.mxu0 0.0
    %564 = vmatpush1.msra.mxu0 0.0
    %565 = vmatprep.subr.mxu0 0.0
    %566 = vmatpush1.msra.mxu0 0.0
    %567 = vmatprep.subr.mxu0 0.0
    %568 = vmatpush1.msra.mxu0 0.0
    %569 = vmatprep.subr.mxu0 0.0
    %570 = vmatpush1.msra.mxu0 0.0
    %571 = vmatprep.subr.mxu0 0.0
    %572 = vmatpush1.msra.mxu0 0.0
    %573 = vmatprep.subr.mxu0 0.0
    %574 = vmatpush1.msra.mxu0 0.0
    %575 = vmatprep.mubr.f32.mxu0 0.0
    %576 = vmatmul.mubr.f32.gmra.mrb[0].mxu0 %v509
    %v577 = vpop.f32.mrb[0].mxu0
    %v578 = vadd.f32 %v501, %v577
    %v579 = vpop.f32.mrb[0].mxu0
    %v580 = vadd.f32 %v503, %v579
    %581 = vdwg.mxu0
    %v582 = vadd.f32 %v578, %v113
    %v583 = vadd.f32 %v580, %v117
    %v584 = vxor.u32 %v582, 2147483648
    %v585 = vxor.u32 %v583, 2147483648
    %v586 = vmul.f32 %v584, 1.442695
    %v587 = vpow.pop %v586
    %v588 = vmul.f32 %v585, 1.442695
    %v589 = vpow.pop %v588
    %v590 = vadd.f32 %v587, 1.0
    %v591 = vadd.f32 %v589, 1.0
    %v592 = vrcp.pop %v590
    %v593 = vmul.f32 1.0, %v592
    %v594 = vrcp.pop %v591
    %v595 = vmul.f32 1.0, %v594
    %v596 = vtanh.pop %v583
    %v597 = vmul.f32 %v593, %v320
    %599 = vrot.lane.b32.xlu0 %v596, 64
    %v600 = vpop.permute.xlu0 %599
    %v602 = vmul.f32 %v593, %v600
    %604 = vrot.lane.b32.xlu0 %v602, 64
    %v605 = vpop.permute.xlu0 %604
    %v607 = vadd.f32 %v597, %v605
    %v608 = vtanh.pop %v607
    %610 = vrot.lane.b32.xlu0 %v608, 64
    %v611 = vpop.permute.xlu0 %610
    %v613 = vmul.f32 %v595, %v611
    %615 = vrot.lane.b32.xlu0 %v428, 64
    %v616 = vpop.permute.xlu0 %615
    %v618 = vsel %vm134, %v613, %v616
    %619 = vmatprep.subr.mxu0 %v77
    %620 = vmatpush1.msra.mxu0 %v76
    %621 = vmatprep.subr.mxu0 %v79
    %622 = vmatpush1.msra.mxu0 %v78
    %623 = vmatprep.subr.mxu0 %v81
    %624 = vmatpush1.msra.mxu0 %v80
    %625 = vmatprep.subr.mxu0 %v83
    %626 = vmatpush1.msra.mxu0 %v82
    %627 = vmatprep.subr.mxu0 %v85
    %628 = vmatpush1.msra.mxu0 %v84
    %629 = vmatprep.subr.mxu0 %v87
    %630 = vmatpush1.msra.mxu0 %v86
    %631 = vmatprep.subr.mxu0 %v89
    %632 = vmatpush1.msra.mxu0 %v88
    %633 = vmatprep.subr.mxu0 %v91
    %634 = vmatpush1.msra.mxu0 %v90
    %635 = vmatprep.subr.mxu0 %v93
    %636 = vmatpush1.msra.mxu0 %v92
    %637 = vmatprep.subr.mxu0 %v95
    %638 = vmatpush1.msra.mxu0 %v94
    %639 = vmatprep.subr.mxu0 %v97
    %640 = vmatpush1.msra.mxu0 %v96
    %641 = vmatprep.subr.mxu0 %v99
    %642 = vmatpush1.msra.mxu0 %v98
    %643 = vmatprep.subr.mxu0 %v101
    %644 = vmatpush1.msra.mxu0 %v100
    %645 = vmatprep.subr.mxu0 %v103
    %646 = vmatpush1.msra.mxu0 %v102
    %647 = vmatprep.subr.mxu0 %v105
    %648 = vmatpush1.msra.mxu0 %v104
    %649 = vmatprep.subr.mxu0 %v107
    %650 = vmatpush1.msra.mxu0 %v106
    %651 = vmatprep.subr.mxu0 0.0
    %652 = vmatpush1.msra.mxu0 0.0
    %653 = vmatprep.subr.mxu0 0.0
    %654 = vmatpush1.msra.mxu0 0.0
    %655 = vmatprep.subr.mxu0 0.0
    %656 = vmatpush1.msra.mxu0 0.0
    %657 = vmatprep.subr.mxu0 0.0
    %658 = vmatpush1.msra.mxu0 0.0
    %659 = vmatprep.subr.mxu0 0.0
    %660 = vmatpush1.msra.mxu0 0.0
    %661 = vmatprep.subr.mxu0 0.0
    %662 = vmatpush1.msra.mxu0 0.0
    %663 = vmatprep.subr.mxu0 0.0
    %664 = vmatpush1.msra.mxu0 0.0
    %665 = vmatprep.subr.mxu0 0.0
    %666 = vmatpush1.msra.mxu0 0.0
    %667 = vmatprep.subr.mxu0 0.0
    %668 = vmatpush1.msra.mxu0 0.0
    %669 = vmatprep.subr.mxu0 0.0
    %670 = vmatpush1.msra.mxu0 0.0
    %671 = vmatprep.subr.mxu0 0.0
    %672 = vmatpush1.msra.mxu0 0.0
    %673 = vmatprep.subr.mxu0 0.0
    %674 = vmatpush1.msra.mxu0 0.0
    %675 = vmatprep.subr.mxu0 0.0
    %676 = vmatpush1.msra.mxu0 0.0
    %677 = vmatprep.subr.mxu0 0.0
    %678 = vmatpush1.msra.mxu0 0.0
    %679 = vmatprep.subr.mxu0 0.0
    %680 = vmatpush1.msra.mxu0 0.0
    %681 = vmatprep.subr.mxu0 0.0
    %682 = vmatpush1.msra.mxu0 0.0
    %683 = vmatprep.mubr.f32.mxu0 0.0
    %684 = vmatmul.mubr.f32.gmra.mrb[0].mxu0 %v618
    %v685 = vpop.f32.mrb[0].mxu0
    %v686 = vadd.f32 %v125, %v685
    %v687 = vpop.f32.mrb[0].mxu0
    %v688 = vadd.f32 %v129, %v687
    %689 = vdwg.mxu0
    %v690 = vxor.u32 %v686, 2147483648
    %v691 = vxor.u32 %v688, 2147483648
    %v692 = vmul.f32 %v690, 1.442695
    %v693 = vpow.pop %v692
    %v694 = vmul.f32 %v691, 1.442695
    %v695 = vpow.pop %v694
    %v696 = vadd.f32 %v693, 1.0
    %v697 = vadd.f32 %v695, 1.0
    %v698 = vrcp.pop %v696
    %v699 = vmul.f32 1.0, %v698
    %v700 = vrcp.pop %v697
    %v701 = vmul.f32 1.0, %v700
    %v702 = vtanh.pop %v688
    %v703 = vmul.f32 %v699, %v422
    %705 = vrot.lane.b32.xlu0 %v702, 64
    %v706 = vpop.permute.xlu0 %705
    %v708 = vmul.f32 %v699, %v706
    %710 = vrot.lane.b32.xlu0 %v708, 64
    %v711 = vpop.permute.xlu0 %710
    %v713 = vadd.f32 %v703, %v711
    %v714 = vtanh.pop %v713
    %716 = vrot.lane.b32.xlu0 %v714, 64
    %v717 = vpop.permute.xlu0 %716
    %v719 = vmul.f32 %v701, %v717
    %v720 = vld [vmem:[%s0 + $0x2] sm:$0x1]
    %v721 = vld [vmem:[%s0 + $0xa] sm:$0x1]
    %v723 = vsel %vm134, %v613, 0
    %725 = vmatprep.subr.mxu0 %v61
    %726 = vmatpush1.msra.mxu0 %v60
    %727 = vmatprep.subr.mxu0 %v63
    %728 = vmatpush1.msra.mxu0 %v62
    %729 = vmatprep.subr.mxu0 %v65
    %730 = vmatpush1.msra.mxu0 %v64
    %731 = vmatprep.subr.mxu0 %v67
    %732 = vmatpush1.msra.mxu0 %v66
    %733 = vmatprep.subr.mxu0 %v69
    %734 = vmatpush1.msra.mxu0 %v68
    %735 = vmatprep.subr.mxu0 %v71
    %736 = vmatpush1.msra.mxu0 %v70
    %737 = vmatprep.subr.mxu0 %v73
    %738 = vmatpush1.msra.mxu0 %v72
    %739 = vmatprep.subr.mxu0 %v75
    %740 = vmatpush1.msra.mxu0 %v74
    %741 = vmatprep.subr.mxu0 0.0
    %742 = vmatpush1.msra.mxu0 0.0
    %743 = vmatprep.subr.mxu0 0.0
    %744 = vmatpush1.msra.mxu0 0.0
    %745 = vmatprep.subr.mxu0 0.0
    %746 = vmatpush1.msra.mxu0 0.0
    %747 = vmatprep.subr.mxu0 0.0
    %748 = vmatpush1.msra.mxu0 0.0
    %749 = vmatprep.subr.mxu0 0.0
    %750 = vmatpush1.msra.mxu0 0.0
    %751 = vmatprep.subr.mxu0 0.0
    %752 = vmatpush1.msra.mxu0 0.0
    %753 = vmatprep.subr.mxu0 0.0
    %754 = vmatpush1.msra.mxu0 0.0
    %755 = vmatprep.subr.mxu0 0.0
    %756 = vmatpush1.msra.mxu0 0.0
    %757 = vmatprep.subr.mxu0 0.0
    %758 = vmatpush1.msra.mxu0 0.0
    %759 = vmatprep.subr.mxu0 0.0
    %760 = vmatpush1.msra.mxu0 0.0
    %761 = vmatprep.subr.mxu0 0.0
    %762 = vmatpush1.msra.mxu0 0.0
    %763 = vmatprep.subr.mxu0 0.0
    %764 = vmatpush1.msra.mxu0 0.0
    %765 = vmatprep.subr.mxu0 0.0
    %766 = vmatpush1.msra.mxu0 0.0
    %767 = vmatprep.subr.mxu0 0.0
    %768 = vmatpush1.msra.mxu0 0.0
    %769 = vmatprep.subr.mxu0 0.0
    %770 = vmatpush1.msra.mxu0 0.0
    %771 = vmatprep.subr.mxu0 0.0
    %772 = vmatpush1.msra.mxu0 0.0
    %773 = vmatprep.subr.mxu0 0.0
    %774 = vmatpush1.msra.mxu0 0.0
    %775 = vmatprep.subr.mxu0 0.0
    %776 = vmatpush1.msra.mxu0 0.0
    %777 = vmatprep.subr.mxu0 0.0
    %778 = vmatpush1.msra.mxu0 0.0
    %779 = vmatprep.subr.mxu0 0.0
    %780 = vmatpush1.msra.mxu0 0.0
    %781 = vmatprep.subr.mxu0 0.0
    %782 = vmatpush1.msra.mxu0 0.0
    %783 = vmatprep.subr.mxu0 0.0
    %784 = vmatpush1.msra.mxu0 0.0
    %785 = vmatprep.subr.mxu0 0.0
    %786 = vmatpush1.msra.mxu0 0.0
    %787 = vmatprep.subr.mxu0 0.0
    %788 = vmatpush1.msra.mxu0 0.0
    %789 = vmatprep.mubr.f32.mxu0 0.0
    %790 = vmatmul.mubr.f32.gmra.mrb[0].mxu0 %v723
    %v791 = vpop.f32.mrb[0].mxu0
    %v792 = vadd.f32 0.0, %v791
    %v793 = vpop.f32.mrb[0].mxu0
    %v794 = vadd.f32 0.0, %v793
    %795 = vdwg.mxu0
    %v798 = vrot.slane %v721, 7
    %v799 = vsel %vm212, %v798, %v720
    %v800 = vsel %vm216, %v799, 0
    %802 = vmatprep.subr.mxu0 %v222
    %803 = vmatpush1.msra.mxu0 %v220
    %804 = vmatprep.subr.mxu0 0.0
    %805 = vmatpush1.msra.mxu0 0.0
    %806 = vmatprep.subr.mxu0 0.0
    %807 = vmatpush1.msra.mxu0 0.0
    %808 = vmatprep.subr.mxu0 0.0
    %809 = vmatpush1.msra.mxu0 0.0
    %810 = vmatprep.subr.mxu0 0.0
    %811 = vmatpush1.msra.mxu0 0.0
    %812 = vmatprep.subr.mxu0 0.0
    %813 = vmatpush1.msra.mxu0 0.0
    %814 = vmatprep.subr.mxu0 0.0
    %815 = vmatpush1.msra.mxu0 0.0
    %816 = vmatprep.subr.mxu0 0.0
    %817 = vmatpush1.msra.mxu0 0.0
    %818 = vmatprep.subr.mxu0 0.0
    %819 = vmatpush1.msra.mxu0 0.0
    %820 = vmatprep.subr.mxu0 0.0
    %821 = vmatpush1.msra.mxu0 0.0
    %822 = vmatprep.subr.mxu0 0.0
    %823 = vmatpush1.msra.mxu0 0.0
    %824 = vmatprep.subr.mxu0 0.0
    %825 = vmatpush1.msra.mxu0 0.0
    %826 = vmatprep.subr.mxu0 0.0
    %827 = vmatpush1.msra.mxu0 0.0
    %828 = vmatprep.subr.mxu0 0.0
    %829 = vmatpush1.msra.mxu0 0.0
    %830 = vmatprep.subr.mxu0 0.0
    %831 = vmatpush1.msra.mxu0 0.0
    %832 = vmatprep.subr.mxu0 0.0
    %833 = vmatpush1.msra.mxu0 0.0
    %834 = vmatprep.subr.mxu0 0.0
    %835 = vmatpush1.msra.mxu0 0.0
    %836 = vmatprep.subr.mxu0 0.0
    %837 = vmatpush1.msra.mxu0 0.0
    %838 = vmatprep.subr.mxu0 0.0
    %839 = vmatpush1.msra.mxu0 0.0
    %840 = vmatprep.subr.mxu0 0.0
    %841 = vmatpush1.msra.mxu0 0.0
    %842 = vmatprep.subr.mxu0 0.0
    %843 = vmatpush1.msra.mxu0 0.0
    %844 = vmatprep.subr.mxu0 0.0
    %845 = vmatpush1.msra.mxu0 0.0
    %846 = vmatprep.subr.mxu0 0.0
    %847 = vmatpush1.msra.mxu0 0.0
    %848 = vmatprep.subr.mxu0 0.0
    %849 = vmatpush1.msra.mxu0 0.0
    %850 = vmatprep.subr.mxu0 0.0
    %851 = vmatpush1.msra.mxu0 0.0
    %852 = vmatprep.subr.mxu0 0.0
    %853 = vmatpush1.msra.mxu0 0.0
    %854 = vmatprep.subr.mxu0 0.0
    %855 = vmatpush1.msra.mxu0 0.0
    %856 = vmatprep.subr.mxu0 0.0
    %857 = vmatpush1.msra.mxu0 0.0
    %858 = vmatprep.subr.mxu0 0.0
    %859 = vmatpush1.msra.mxu0 0.0
    %860 = vmatprep.subr.mxu0 0.0
    %861 = vmatpush1.msra.mxu0 0.0
    %862 = vmatprep.subr.mxu0 0.0
    %863 = vmatpush1.msra.mxu0 0.0
    %864 = vmatprep.subr.mxu0 0.0
    %865 = vmatpush1.msra.mxu0 0.0
    %866 = vmatprep.mubr.f32.mxu0 0.0
    %867 = vmatmul.mubr.f32.gmra.mrb[0].mxu0 %v800
    %v868 = vpop.f32.mrb[0].mxu0
    %v869 = vadd.f32 %v792, %v868
    %v870 = vpop.f32.mrb[0].mxu0
    %v871 = vadd.f32 %v794, %v870
    %872 = vdwg.mxu0
    %v873 = vadd.f32 %v869, %v113
    %v874 = vadd.f32 %v871, %v117
    %v875 = vxor.u32 %v873, 2147483648
    %v876 = vxor.u32 %v874, 2147483648
    %v877 = vmul.f32 %v875, 1.442695
    %v878 = vpow.pop %v877
    %v879 = vmul.f32 %v876, 1.442695
    %v880 = vpow.pop %v879
    %v881 = vadd.f32 %v878, 1.0
    %v882 = vadd.f32 %v880, 1.0
    %v883 = vrcp.pop %v881
    %v884 = vmul.f32 1.0, %v883
    %v885 = vrcp.pop %v882
    %v886 = vmul.f32 1.0, %v885
    %v887 = vtanh.pop %v874
    %v888 = vmul.f32 %v884, %v607
    %890 = vrot.lane.b32.xlu0 %v887, 64
    %v891 = vpop.permute.xlu0 %890
    %v893 = vmul.f32 %v884, %v891
    %895 = vrot.lane.b32.xlu0 %v893, 64
    %v896 = vpop.permute.xlu0 %895
    %v898 = vadd.f32 %v888, %v896
    %v899 = vtanh.pop %v898
    %901 = vrot.lane.b32.xlu0 %v899, 64
    %v902 = vpop.permute.xlu0 %901
    %v904 = vmul.f32 %v886, %v902
    %906 = vrot.lane.b32.xlu0 %v719, 64
    %v907 = vpop.permute.xlu0 %906
    %v909 = vsel %vm134, %v904, %v907
    %910 = vmatprep.subr.mxu0 %v77
    %911 = vmatpush1.msra.mxu0 %v76
    %912 = vmatprep.subr.mxu0 %v79
    %913 = vmatpush1.msra.mxu0 %v78
    %914 = vmatprep.subr.mxu0 %v81
    %915 = vmatpush1.msra.mxu0 %v80
    %916 = vmatprep.subr.mxu0 %v83
    %917 = vmatpush1.msra.mxu0 %v82
    %918 = vmatprep.subr.mxu0 %v85
    %919 = vmatpush1.msra.mxu0 %v84
    %920 = vmatprep.subr.mxu0 %v87
    %921 = vmatpush1.msra.mxu0 %v86
    %922 = vmatprep.subr.mxu0 %v89
    %923 = vmatpush1.msra.mxu0 %v88
    %924 = vmatprep.subr.mxu0 %v91
    %925 = vmatpush1.msra.mxu0 %v90
    %926 = vmatprep.subr.mxu0 %v93
    %927 = vmatpush1.msra.mxu0 %v92
    %928 = vmatprep.subr.mxu0 %v95
    %929 = vmatpush1.msra.mxu0 %v94
    %930 = vmatprep.subr.mxu0 %v97
    %931 = vmatpush1.msra.mxu0 %v96
    %932 = vmatprep.subr.mxu0 %v99
    %933 = vmatpush1.msra.mxu0 %v98
    %934 = vmatprep.subr.mxu0 %v101
    %935 = vmatpush1.msra.mxu0 %v100
    %936 = vmatprep.subr.mxu0 %v103
    %937 = vmatpush1.msra.mxu0 %v102
    %938 = vmatprep.subr.mxu0 %v105
    %939 = vmatpush1.msra.mxu0 %v104
    %940 = vmatprep.subr.mxu0 %v107
    %941 = vmatpush1.msra.mxu0 %v106
    %942 = vmatprep.subr.mxu0 0.0
    %943 = vmatpush1.msra.mxu0 0.0
    %944 = vmatprep.subr.mxu0 0.0
    %945 = vmatpush1.msra.mxu0 0.0
    %946 = vmatprep.subr.mxu0 0.0
    %947 = vmatpush1.msra.mxu0 0.0
    %948 = vmatprep.subr.mxu0 0.0
    %949 = vmatpush1.msra.mxu0 0.0
    %950 = vmatprep.subr.mxu0 0.0
    %951 = vmatpush1.msra.mxu0 0.0
    %952 = vmatprep.subr.mxu0 0.0
    %953 = vmatpush1.msra.mxu0 0.0
    %954 = vmatprep.subr.mxu0 0.0
    %955 = vmatpush1.msra.mxu0 0.0
    %956 = vmatprep.subr.mxu0 0.0
    %957 = vmatpush1.msra.mxu0 0.0
    %958 = vmatprep.subr.mxu0 0.0
    %959 = vmatpush1.msra.mxu0 0.0
    %960 = vmatprep.subr.mxu0 0.0
    %961 = vmatpush1.msra.mxu0 0.0
    %962 = vmatprep.subr.mxu0 0.0
    %963 = vmatpush1.msra.mxu0 0.0
    %964 = vmatprep.subr.mxu0 0.0
    %965 = vmatpush1.msra.mxu0 0.0
    %966 = vmatprep.subr.mxu0 0.0
    %967 = vmatpush1.msra.mxu0 0.0
    %968 = vmatprep.subr.mxu0 0.0
    %969 = vmatpush1.msra.mxu0 0.0
    %970 = vmatprep.subr.mxu0 0.0
    %971 = vmatpush1.msra.mxu0 0.0
    %972 = vmatprep.subr.mxu0 0.0
    %973 = vmatpush1.msra.mxu0 0.0
    %974 = vmatprep.mubr.f32.mxu0 0.0
    %975 = vmatmul.mubr.f32.gmra.mrb[0].mxu0 %v909
    %v976 = vpop.f32.mrb[0].mxu0
    %v977 = vadd.f32 %v125, %v976
    %v978 = vpop.f32.mrb[0].mxu0
    %v979 = vadd.f32 %v129, %v978
    %980 = vdwg.mxu0
    %v981 = vxor.u32 %v977, 2147483648
    %v982 = vxor.u32 %v979, 2147483648
    %v983 = vmul.f32 %v981, 1.442695
    %v984 = vpow.pop %v983
    %v985 = vmul.f32 %v982, 1.442695
    %v986 = vpow.pop %v985
    %v987 = vadd.f32 %v984, 1.0
    %v988 = vadd.f32 %v986, 1.0
    %v989 = vrcp.pop %v987
    %v990 = vmul.f32 1.0, %v989
    %v991 = vrcp.pop %v988
    %v992 = vmul.f32 1.0, %v991
    %v993 = vtanh.pop %v979
    %v994 = vmul.f32 %v990, %v713
    %996 = vrot.lane.b32.xlu0 %v993, 64
    %v997 = vpop.permute.xlu0 %996
    %v999 = vmul.f32 %v990, %v997
    %1001 = vrot.lane.b32.xlu0 %v999, 64
    %v1002 = vpop.permute.xlu0 %1001
    %v1004 = vadd.f32 %v994, %v1002
    %v1005 = vtanh.pop %v1004
    %1007 = vrot.lane.b32.xlu0 %v1005, 64
    %v1008 = vpop.permute.xlu0 %1007
    %v1010 = vmul.f32 %v992, %v1008
    %v1011 = vld [vmem:[%s0 + $0x3] sm:$0x1]
    %v1012 = vld [vmem:[%s0 + $0xb] sm:$0x1]
    %v1014 = vsel %vm134, %v904, 0
    %1016 = vmatprep.subr.mxu0 %v61
    %1017 = vmatpush1.msra.mxu0 %v60
    %1018 = vmatprep.subr.mxu0 %v63
    %1019 = vmatpush1.msra.mxu0 %v62
    %1020 = vmatprep.subr.mxu0 %v65
    %1021 = vmatpush1.msra.mxu0 %v64
    %1022 = vmatprep.subr.mxu0 %v67
    %1023 = vmatpush1.msra.mxu0 %v66
    %1024 = vmatprep.subr.mxu0 %v69
    %1025 = vmatpush1.msra.mxu0 %v68
    %1026 = vmatprep.subr.mxu0 %v71
    %1027 = vmatpush1.msra.mxu0 %v70
    %1028 = vmatprep.subr.mxu0 %v73
    %1029 = vmatpush1.msra.mxu0 %v72
    %1030 = vmatprep.subr.mxu0 %v75
    %1031 = vmatpush1.msra.mxu0 %v74
    %1032 = vmatprep.subr.mxu0 0.0
    %1033 = vmatpush1.msra.mxu0 0.0
    %1034 = vmatprep.subr.mxu0 0.0
    %1035 = vmatpush1.msra.mxu0 0.0
    %1036 = vmatprep.subr.mxu0 0.0
    %1037 = vmatpush1.msra.mxu0 0.0
    %1038 = vmatprep.subr.mxu0 0.0
    %1039 = vmatpush1.msra.mxu0 0.0
    %1040 = vmatprep.subr.mxu0 0.0
    %1041 = vmatpush1.msra.mxu0 0.0
    %1042 = vmatprep.subr.mxu0 0.0
    %1043 = vmatpush1.msra.mxu0 0.0
    %1044 = vmatprep.subr.mxu0 0.0
    %1045 = vmatpush1.msra.mxu0 0.0
    %1046 = vmatprep.subr.mxu0 0.0
    %1047 = vmatpush1.msra.mxu0 0.0
    %1048 = vmatprep.subr.mxu0 0.0
    %1049 = vmatpush1.msra.mxu0 0.0
    %1050 = vmatprep.subr.mxu0 0.0
    %1051 = vmatpush1.msra.mxu0 0.0
    %1052 = vmatprep.subr.mxu0 0.0
    %1053 = vmatpush1.msra.mxu0 0.0
    %1054 = vmatprep.subr.mxu0 0.0
    %1055 = vmatpush1.msra.mxu0 0.0
    %1056 = vmatprep.subr.mxu0 0.0
    %1057 = vmatpush1.msra.mxu0 0.0
    %1058 = vmatprep.subr.mxu0 0.0
    %1059 = vmatpush1.msra.mxu0 0.0
    %1060 = vmatprep.subr.mxu0 0.0
    %1061 = vmatpush1.msra.mxu0 0.0
    %1062 = vmatprep.subr.mxu0 0.0
    %1063 = vmatpush1.msra.mxu0 0.0
    %1064 = vmatprep.subr.mxu0 0.0
    %1065 = vmatpush1.msra.mxu0 0.0
    %1066 = vmatprep.subr.mxu0 0.0
    %1067 = vmatpush1.msra.mxu0 0.0
    %1068 = vmatprep.subr.mxu0 0.0
    %1069 = vmatpush1.msra.mxu0 0.0
    %1070 = vmatprep.subr.mxu0 0.0
    %1071 = vmatpush1.msra.mxu0 0.0
    %1072 = vmatprep.subr.mxu0 0.0
    %1073 = vmatpush1.msra.mxu0 0.0
    %1074 = vmatprep.subr.mxu0 0.0
    %1075 = vmatpush1.msra.mxu0 0.0
    %1076 = vmatprep.subr.mxu0 0.0
    %1077 = vmatpush1.msra.mxu0 0.0
    %1078 = vmatprep.subr.mxu0 0.0
    %1079 = vmatpush1.msra.mxu0 0.0
    %1080 = vmatprep.mubr.f32.mxu0 0.0
    %1081 = vmatmul.mubr.f32.gmra.mrb[0].mxu0 %v1014
    %v1082 = vpop.f32.mrb[0].mxu0
    %v1083 = vadd.f32 0.0, %v1082
    %v1084 = vpop.f32.mrb[0].mxu0
    %v1085 = vadd.f32 0.0, %v1084
    %1086 = vdwg.mxu0
    %v1089 = vrot.slane %v1012, 7
    %v1090 = vsel %vm212, %v1089, %v1011
    %v1091 = vsel %vm216, %v1090, 0
    %1093 = vmatprep.subr.mxu0 %v222
    %1094 = vmatpush1.msra.mxu0 %v220
    %1095 = vmatprep.subr.mxu0 0.0
    %1096 = vmatpush1.msra.mxu0 0.0
    %1097 = vmatprep.subr.mxu0 0.0
    %1098 = vmatpush1.msra.mxu0 0.0
    %1099 = vmatprep.subr.mxu0 0.0
    %1100 = vmatpush1.msra.mxu0 0.0
    %1101 = vmatprep.subr.mxu0 0.0
    %1102 = vmatpush1.msra.mxu0 0.0
    %1103 = vmatprep.subr.mxu0 0.0
    %1104 = vmatpush1.msra.mxu0 0.0
    %1105 = vmatprep.subr.mxu0 0.0
    %1106 = vmatpush1.msra.mxu0 0.0
    %1107 = vmatprep.subr.mxu0 0.0
    %1108 = vmatpush1.msra.mxu0 0.0
    %1109 = vmatprep.subr.mxu0 0.0
    %1110 = vmatpush1.msra.mxu0 0.0
    %1111 = vmatprep.subr.mxu0 0.0
    %1112 = vmatpush1.msra.mxu0 0.0
    %1113 = vmatprep.subr.mxu0 0.0
    %1114 = vmatpush1.msra.mxu0 0.0
    %1115 = vmatprep.subr.mxu0 0.0
    %1116 = vmatpush1.msra.mxu0 0.0
    %1117 = vmatprep.subr.mxu0 0.0
    %1118 = vmatpush1.msra.mxu0 0.0
    %1119 = vmatprep.subr.mxu0 0.0
    %1120 = vmatpush1.msra.mxu0 0.0
    %1121 = vmatprep.subr.mxu0 0.0
    %1122 = vmatpush1.msra.mxu0 0.0
    %1123 = vmatprep.subr.mxu0 0.0
    %1124 = vmatpush1.msra.mxu0 0.0
    %1125 = vmatprep.subr.mxu0 0.0
    %1126 = vmatpush1.msra.mxu0 0.0
    %1127 = vmatprep.subr.mxu0 0.0
    %1128 = vmatpush1.msra.mxu0 0.0
    %1129 = vmatprep.subr.mxu0 0.0
    %1130 = vmatpush1.msra.mxu0 0.0
    %1131 = vmatprep.subr.mxu0 0.0
    %1132 = vmatpush1.msra.mxu0 0.0
    %1133 = vmatprep.subr.mxu0 0.0
    %1134 = vmatpush1.msra.mxu0 0.0
    %1135 = vmatprep.subr.mxu0 0.0
    %1136 = vmatpush1.msra.mxu0 0.0
    %1137 = vmatprep.subr.mxu0 0.0
    %1138 = vmatpush1.msra.mxu0 0.0
    %1139 = vmatprep.subr.mxu0 0.0
    %1140 = vmatpush1.msra.mxu0 0.0
    %1141 = vmatprep.subr.mxu0 0.0
    %1142 = vmatpush1.msra.mxu0 0.0
    %1143 = vmatprep.subr.mxu0 0.0
    %1144 = vmatpush1.msra.mxu0 0.0
    %1145 = vmatprep.subr.mxu0 0.0
    %1146 = vmatpush1.msra.mxu0 0.0
    %1147 = vmatprep.subr.mxu0 0.0
    %1148 = vmatpush1.msra.mxu0 0.0
    %1149 = vmatprep.subr.mxu0 0.0
    %1150 = vmatpush1.msra.mxu0 0.0
    %1151 = vmatprep.subr.mxu0 0.0
    %1152 = vmatpush1.msra.mxu0 0.0
    %1153 = vmatprep.subr.mxu0 0.0
    %1154 = vmatpush1.msra.mxu0 0.0
    %1155 = vmatprep.subr.mxu0 0.0
    %1156 = vmatpush1.msra.mxu0 0.0
    %1157 = vmatprep.mubr.f32.mxu0 0.0
    %1158 = vmatmul.mubr.f32.gmra.mrb[0].mxu0 %v1091
    %v1159 = vpop.f32.mrb[0].mxu0
    %v1160 = vadd.f32 %v1083, %v1159
    %v1161 = vpop.f32.mrb[0].mxu0
    %v1162 = vadd.f32 %v1085, %v1161
    %1163 = vdwg.mxu0
    %v1164 = vadd.f32 %v1160, %v113
    %v1165 = vadd.f32 %v1162, %v117
    %v1166 = vxor.u32 %v1164, 2147483648
    %v1167 = vxor.u32 %v1165, 2147483648
    %v1168 = vmul.f32 %v1166, 1.442695
    %v1169 = vpow.pop %v1168
    %v1170 = vmul.f32 %v1167, 1.442695
    %v1171 = vpow.pop %v1170
    %v1172 = vadd.f32 %v1169, 1.0
    %v1173 = vadd.f32 %v1171, 1.0
    %v1174 = vrcp.pop %v1172
    %v1175 = vmul.f32 1.0, %v1174
    %v1176 = vrcp.pop %v1173
    %v1177 = vmul.f32 1.0, %v1176
    %v1178 = vtanh.pop %v1165
    %v1179 = vmul.f32 %v1175, %v898
    %1181 = vrot.lane.b32.xlu0 %v1178, 64
    %v1182 = vpop.permute.xlu0 %1181
    %v1184 = vmul.f32 %v1175, %v1182
    %1186 = vrot.lane.b32.xlu0 %v1184, 64
    %v1187 = vpop.permute.xlu0 %1186
    %v1189 = vadd.f32 %v1179, %v1187
    %v1190 = vtanh.pop %v1189
    %1192 = vrot.lane.b32.xlu0 %v1190, 64
    %v1193 = vpop.permute.xlu0 %1192
    %v1195 = vmul.f32 %v1177, %v1193
    %1197 = vrot.lane.b32.xlu0 %v1010, 64
    %v1198 = vpop.permute.xlu0 %1197
    %v1200 = vsel %vm134, %v1195, %v1198
    %1201 = vmatprep.subr.mxu0 %v77
    %1202 = vmatpush1.msra.mxu0 %v76
    %1203 = vmatprep.subr.mxu0 %v79
    %1204 = vmatpush1.msra.mxu0 %v78
    %1205 = vmatprep.subr.mxu0 %v81
    %1206 = vmatpush1.msra.mxu0 %v80
    %1207 = vmatprep.subr.mxu0 %v83
    %1208 = vmatpush1.msra.mxu0 %v82
    %1209 = vmatprep.subr.mxu0 %v85
    %1210 = vmatpush1.msra.mxu0 %v84
    %1211 = vmatprep.subr.mxu0 %v87
    %1212 = vmatpush1.msra.mxu0 %v86
    %1213 = vmatprep.subr.mxu0 %v89
    %1214 = vmatpush1.msra.mxu0 %v88
    %1215 = vmatprep.subr.mxu0 %v91
    %1216 = vmatpush1.msra.mxu0 %v90
    %1217 = vmatprep.subr.mxu0 %v93
    %1218 = vmatpush1.msra.mxu0 %v92
    %1219 = vmatprep.subr.mxu0 %v95
    %1220 = vmatpush1.msra.mxu0 %v94
    %1221 = vmatprep.subr.mxu0 %v97
    %1222 = vmatpush1.msra.mxu0 %v96
    %1223 = vmatprep.subr.mxu0 %v99
    %1224 = vmatpush1.msra.mxu0 %v98
    %1225 = vmatprep.subr.mxu0 %v101
    %1226 = vmatpush1.msra.mxu0 %v100
    %1227 = vmatprep.subr.mxu0 %v103
    %1228 = vmatpush1.msra.mxu0 %v102
    %1229 = vmatprep.subr.mxu0 %v105
    %1230 = vmatpush1.msra.mxu0 %v104
    %1231 = vmatprep.subr.mxu0 %v107
    %1232 = vmatpush1.msra.mxu0 %v106
    %1233 = vmatprep.subr.mxu0 0.0
    %1234 = vmatpush1.msra.mxu0 0.0
    %1235 = vmatprep.subr.mxu0 0.0
    %1236 = vmatpush1.msra.mxu0 0.0
    %1237 = vmatprep.subr.mxu0 0.0
    %1238 = vmatpush1.msra.mxu0 0.0
    %1239 = vmatprep.subr.mxu0 0.0
    %1240 = vmatpush1.msra.mxu0 0.0
    %1241 = vmatprep.subr.mxu0 0.0
    %1242 = vmatpush1.msra.mxu0 0.0
    %1243 = vmatprep.subr.mxu0 0.0
    %1244 = vmatpush1.msra.mxu0 0.0
    %1245 = vmatprep.subr.mxu0 0.0
    %1246 = vmatpush1.msra.mxu0 0.0
    %1247 = vmatprep.subr.mxu0 0.0
    %1248 = vmatpush1.msra.mxu0 0.0
    %1249 = vmatprep.subr.mxu0 0.0
    %1250 = vmatpush1.msra.mxu0 0.0
    %1251 = vmatprep.subr.mxu0 0.0
    %1252 = vmatpush1.msra.mxu0 0.0
    %1253 = vmatprep.subr.mxu0 0.0
    %1254 = vmatpush1.msra.mxu0 0.0
    %1255 = vmatprep.subr.mxu0 0.0
    %1256 = vmatpush1.msra.mxu0 0.0
    %1257 = vmatprep.subr.mxu0 0.0
    %1258 = vmatpush1.msra.mxu0 0.0
    %1259 = vmatprep.subr.mxu0 0.0
    %1260 = vmatpush1.msra.mxu0 0.0
    %1261 = vmatprep.subr.mxu0 0.0
    %1262 = vmatpush1.msra.mxu0 0.0
    %1263 = vmatprep.subr.mxu0 0.0
    %1264 = vmatpush1.msra.mxu0 0.0
    %1265 = vmatprep.mubr.f32.mxu0 0.0
    %1266 = vmatmul.mubr.f32.gmra.mrb[0].mxu0 %v1200
    %v1267 = vpop.f32.mrb[0].mxu0
    %v1268 = vadd.f32 %v125, %v1267
    %v1269 = vpop.f32.mrb[0].mxu0
    %v1270 = vadd.f32 %v129, %v1269
    %1271 = vdwg.mxu0
    %v1272 = vxor.u32 %v1268, 2147483648
    %v1273 = vxor.u32 %v1270, 2147483648
    %v1274 = vmul.f32 %v1272, 1.442695
    %v1275 = vpow.pop %v1274
    %v1276 = vmul.f32 %v1273, 1.442695
    %v1277 = vpow.pop %v1276
    %v1278 = vadd.f32 %v1275, 1.0
    %v1279 = vadd.f32 %v1277, 1.0
    %v1280 = vrcp.pop %v1278
    %v1281 = vmul.f32 1.0, %v1280
    %v1282 = vrcp.pop %v1279
    %v1283 = vmul.f32 1.0, %v1282
    %v1284 = vtanh.pop %v1270
    %v1285 = vmul.f32 %v1281, %v1004
    %1287 = vrot.lane.b32.xlu0 %v1284, 64
    %v1288 = vpop.permute.xlu0 %1287
    %v1290 = vmul.f32 %v1281, %v1288
    %1292 = vrot.lane.b32.xlu0 %v1290, 64
    %v1293 = vpop.permute.xlu0 %1292
    %v1295 = vadd.f32 %v1285, %v1293
    %v1296 = vtanh.pop %v1295
    %1298 = vrot.lane.b32.xlu0 %v1296, 64
    %v1299 = vpop.permute.xlu0 %1298
    %v1301 = vmul.f32 %v1283, %v1299
    %v1302 = vld [vmem:[%s0 + $0x4] sm:$0x1]
    %v1303 = vld [vmem:[%s0 + $0xc] sm:$0x1]
    %v1305 = vsel %vm134, %v1195, 0
    %1307 = vmatprep.subr.mxu0 %v61
    %1308 = vmatpush1.msra.mxu0 %v60
    %1309 = vmatprep.subr.mxu0 %v63
    %1310 = vmatpush1.msra.mxu0 %v62
    %1311 = vmatprep.subr.mxu0 %v65
    %1312 = vmatpush1.msra.mxu0 %v64
    %1313 = vmatprep.subr.mxu0 %v67
    %1314 = vmatpush1.msra.mxu0 %v66
    %1315 = vmatprep.subr.mxu0 %v69
    %1316 = vmatpush1.msra.mxu0 %v68
    %1317 = vmatprep.subr.mxu0 %v71
    %1318 = vmatpush1.msra.mxu0 %v70
    %1319 = vmatprep.subr.mxu0 %v73
    %1320 = vmatpush1.msra.mxu0 %v72
    %1321 = vmatprep.subr.mxu0 %v75
    %1322 = vmatpush1.msra.mxu0 %v74
    %1323 = vmatprep.subr.mxu0 0.0
    %1324 = vmatpush1.msra.mxu0 0.0
    %1325 = vmatprep.subr.mxu0 0.0
    %1326 = vmatpush1.msra.mxu0 0.0
    %1327 = vmatprep.subr.mxu0 0.0
    %1328 = vmatpush1.msra.mxu0 0.0
    %1329 = vmatprep.subr.mxu0 0.0
    %1330 = vmatpush1.msra.mxu0 0.0
    %1331 = vmatprep.subr.mxu0 0.0
    %1332 = vmatpush1.msra.mxu0 0.0
    %1333 = vmatprep.subr.mxu0 0.0
    %1334 = vmatpush1.msra.mxu0 0.0
    %1335 = vmatprep.subr.mxu0 0.0
    %1336 = vmatpush1.msra.mxu0 0.0
    %1337 = vmatprep.subr.mxu0 0.0
    %1338 = vmatpush1.msra.mxu0 0.0
    %1339 = vmatprep.subr.mxu0 0.0
    %1340 = vmatpush1.msra.mxu0 0.0
    %1341 = vmatprep.subr.mxu0 0.0
    %1342 = vmatpush1.msra.mxu0 0.0
    %1343 = vmatprep.subr.mxu0 0.0
    %1344 = vmatpush1.msra.mxu0 0.0
    %1345 = vmatprep.subr.mxu0 0.0
    %1346 = vmatpush1.msra.mxu0 0.0
    %1347 = vmatprep.subr.mxu0 0.0
    %1348 = vmatpush1.msra.mxu0 0.0
    %1349 = vmatprep.subr.mxu0 0.0
    %1350 = vmatpush1.msra.mxu0 0.0
    %1351 = vmatprep.subr.mxu0 0.0
    %1352 = vmatpush1.msra.mxu0 0.0
    %1353 = vmatprep.subr.mxu0 0.0
    %1354 = vmatpush1.msra.mxu0 0.0
    %1355 = vmatprep.subr.mxu0 0.0
    %1356 = vmatpush1.msra.mxu0 0.0
    %1357 = vmatprep.subr.mxu0 0.0
    %1358 = vmatpush1.msra.mxu0 0.0
    %1359 = vmatprep.subr.mxu0 0.0
    %1360 = vmatpush1.msra.mxu0 0.0
    %1361 = vmatprep.subr.mxu0 0.0
    %1362 = vmatpush1.msra.mxu0 0.0
    %1363 = vmatprep.subr.mxu0 0.0
    %1364 = vmatpush1.msra.mxu0 0.0
    %1365 = vmatprep.subr.mxu0 0.0
    %1366 = vmatpush1.msra.mxu0 0.0
    %1367 = vmatprep.subr.mxu0 0.0
    %1368 = vmatpush1.msra.mxu0 0.0
    %1369 = vmatprep.subr.mxu0 0.0
    %1370 = vmatpush1.msra.mxu0 0.0
    %1371 = vmatprep.mubr.f32.mxu0 0.0
    %1372 = vmatmul.mubr.f32.gmra.mrb[0].mxu0 %v1305
    %v1373 = vpop.f32.mrb[0].mxu0
    %v1374 = vadd.f32 0.0, %v1373
    %v1375 = vpop.f32.mrb[0].mxu0
    %v1376 = vadd.f32 0.0, %v1375
    %1377 = vdwg.mxu0
    %v1380 = vrot.slane %v1303, 7
    %v1381 = vsel %vm212, %v1380, %v1302
    %v1382 = vsel %vm216, %v1381, 0
    %1384 = vmatprep.subr.mxu0 %v222
    %1385 = vmatpush1.msra.mxu0 %v220
    %1386 = vmatprep.subr.mxu0 0.0
    %1387 = vmatpush1.msra.mxu0 0.0
    %1388 = vmatprep.subr.mxu0 0.0
    %1389 = vmatpush1.msra.mxu0 0.0
    %1390 = vmatprep.subr.mxu0 0.0
    %1391 = vmatpush1.msra.mxu0 0.0
    %1392 = vmatprep.subr.mxu0 0.0
    %1393 = vmatpush1.msra.mxu0 0.0
    %1394 = vmatprep.subr.mxu0 0.0
    %1395 = vmatpush1.msra.mxu0 0.0
    %1396 = vmatprep.subr.mxu0 0.0
    %1397 = vmatpush1.msra.mxu0 0.0
    %1398 = vmatprep.subr.mxu0 0.0
    %1399 = vmatpush1.msra.mxu0 0.0
    %1400 = vmatprep.subr.mxu0 0.0
    %1401 = vmatpush1.msra.mxu0 0.0
    %1402 = vmatprep.subr.mxu0 0.0
    %1403 = vmatpush1.msra.mxu0 0.0
    %1404 = vmatprep.subr.mxu0 0.0
    %1405 = vmatpush1.msra.mxu0 0.0
    %1406 = vmatprep.subr.mxu0 0.0
    %1407 = vmatpush1.msra.mxu0 0.0
    %1408 = vmatprep.subr.mxu0 0.0
    %1409 = vmatpush1.msra.mxu0 0.0
    %1410 = vmatprep.subr.mxu0 0.0
    %1411 = vmatpush1.msra.mxu0 0.0
    %1412 = vmatprep.subr.mxu0 0.0
    %1413 = vmatpush1.msra.mxu0 0.0
    %1414 = vmatprep.subr.mxu0 0.0
    %1415 = vmatpush1.msra.mxu0 0.0
    %1416 = vmatprep.subr.mxu0 0.0
    %1417 = vmatpush1.msra.mxu0 0.0
    %1418 = vmatprep.subr.mxu0 0.0
    %1419 = vmatpush1.msra.mxu0 0.0
    %1420 = vmatprep.subr.mxu0 0.0
    %1421 = vmatpush1.msra.mxu0 0.0
    %1422 = vmatprep.subr.mxu0 0.0
    %1423 = vmatpush1.msra.mxu0 0.0
    %1424 = vmatprep.subr.mxu0 0.0
    %1425 = vmatpush1.msra.mxu0 0.0
    %1426 = vmatprep.subr.mxu0 0.0
    %1427 = vmatpush1.msra.mxu0 0.0
    %1428 = vmatprep.subr.mxu0 0.0
    %1429 = vmatpush1.msra.mxu0 0.0
    %1430 = vmatprep.subr.mxu0 0.0
    %1431 = vmatpush1.msra.mxu0 0.0
    %1432 = vmatprep.subr.mxu0 0.0
    %1433 = vmatpush1.msra.mxu0 0.0
    %1434 = vmatprep.subr.mxu0 0.0
    %1435 = vmatpush1.msra.mxu0 0.0
    %1436 = vmatprep.subr.mxu0 0.0
    %1437 = vmatpush1.msra.mxu0 0.0
    %1438 = vmatprep.subr.mxu0 0.0
    %1439 = vmatpush1.msra.mxu0 0.0
    %1440 = vmatprep.subr.mxu0 0.0
    %1441 = vmatpush1.msra.mxu0 0.0
    %1442 = vmatprep.subr.mxu0 0.0
    %1443 = vmatpush1.msra.mxu0 0.0
    %1444 = vmatprep.subr.mxu0 0.0
    %1445 = vmatpush1.msra.mxu0 0.0
    %1446 = vmatprep.subr.mxu0 0.0
    %1447 = vmatpush1.msra.mxu0 0.0
    %1448 = vmatprep.mubr.f32.mxu0 0.0
    %1449 = vmatmul.mubr.f32.gmra.mrb[0].mxu0 %v1382
    %v1450 = vpop.f32.mrb[0].mxu0
    %v1451 = vadd.f32 %v1374, %v1450
    %v1452 = vpop.f32.mrb[0].mxu0
    %v1453 = vadd.f32 %v1376, %v1452
    %1454 = vdwg.mxu0
    %v1455 = vadd.f32 %v1451, %v113
    %v1456 = vadd.f32 %v1453, %v117
    %v1457 = vxor.u32 %v1455, 2147483648
    %v1458 = vxor.u32 %v1456, 2147483648
    %v1459 = vmul.f32 %v1457, 1.442695
    %v1460 = vpow.pop %v1459
    %v1461 = vmul.f32 %v1458, 1.442695
    %v1462 = vpow.pop %v1461
    %v1463 = vadd.f32 %v1460, 1.0
    %v1464 = vadd.f32 %v1462, 1.0
    %v1465 = vrcp.pop %v1463
    %v1466 = vmul.f32 1.0, %v1465
    %v1467 = vrcp.pop %v1464
    %v1468 = vmul.f32 1.0, %v1467
    %v1469 = vtanh.pop %v1456
    %v1470 = vmul.f32 %v1466, %v1189
    %1472 = vrot.lane.b32.xlu0 %v1469, 64
    %v1473 = vpop.permute.xlu0 %1472
    %v1475 = vmul.f32 %v1466, %v1473
    %1477 = vrot.lane.b32.xlu0 %v1475, 64
    %v1478 = vpop.permute.xlu0 %1477
    %v1480 = vadd.f32 %v1470, %v1478
    %v1481 = vtanh.pop %v1480
    %1483 = vrot.lane.b32.xlu0 %v1481, 64
    %v1484 = vpop.permute.xlu0 %1483
    %v1486 = vmul.f32 %v1468, %v1484
    %1488 = vrot.lane.b32.xlu0 %v1301, 64
    %v1489 = vpop.permute.xlu0 %1488
    %v1491 = vsel %vm134, %v1486, %v1489
    %1492 = vmatprep.subr.mxu0 %v77
    %1493 = vmatpush1.msra.mxu0 %v76
    %1494 = vmatprep.subr.mxu0 %v79
    %1495 = vmatpush1.msra.mxu0 %v78
    %1496 = vmatprep.subr.mxu0 %v81
    %1497 = vmatpush1.msra.mxu0 %v80
    %1498 = vmatprep.subr.mxu0 %v83
    %1499 = vmatpush1.msra.mxu0 %v82
    %1500 = vmatprep.subr.mxu0 %v85
    %1501 = vmatpush1.msra.mxu0 %v84
    %1502 = vmatprep.subr.mxu0 %v87
    %1503 = vmatpush1.msra.mxu0 %v86
    %1504 = vmatprep.subr.mxu0 %v89
    %1505 = vmatpush1.msra.mxu0 %v88
    %1506 = vmatprep.subr.mxu0 %v91
    %1507 = vmatpush1.msra.mxu0 %v90
    %1508 = vmatprep.subr.mxu0 %v93
    %1509 = vmatpush1.msra.mxu0 %v92
    %1510 = vmatprep.subr.mxu0 %v95
    %1511 = vmatpush1.msra.mxu0 %v94
    %1512 = vmatprep.subr.mxu0 %v97
    %1513 = vmatpush1.msra.mxu0 %v96
    %1514 = vmatprep.subr.mxu0 %v99
    %1515 = vmatpush1.msra.mxu0 %v98
    %1516 = vmatprep.subr.mxu0 %v101
    %1517 = vmatpush1.msra.mxu0 %v100
    %1518 = vmatprep.subr.mxu0 %v103
    %1519 = vmatpush1.msra.mxu0 %v102
    %1520 = vmatprep.subr.mxu0 %v105
    %1521 = vmatpush1.msra.mxu0 %v104
    %1522 = vmatprep.subr.mxu0 %v107
    %1523 = vmatpush1.msra.mxu0 %v106
    %1524 = vmatprep.subr.mxu0 0.0
    %1525 = vmatpush1.msra.mxu0 0.0
    %1526 = vmatprep.subr.mxu0 0.0
    %1527 = vmatpush1.msra.mxu0 0.0
    %1528 = vmatprep.subr.mxu0 0.0
    %1529 = vmatpush1.msra.mxu0 0.0
    %1530 = vmatprep.subr.mxu0 0.0
    %1531 = vmatpush1.msra.mxu0 0.0
    %1532 = vmatprep.subr.mxu0 0.0
    %1533 = vmatpush1.msra.mxu0 0.0
    %1534 = vmatprep.subr.mxu0 0.0
    %1535 = vmatpush1.msra.mxu0 0.0
    %1536 = vmatprep.subr.mxu0 0.0
    %1537 = vmatpush1.msra.mxu0 0.0
    %1538 = vmatprep.subr.mxu0 0.0
    %1539 = vmatpush1.msra.mxu0 0.0
    %1540 = vmatprep.subr.mxu0 0.0
    %1541 = vmatpush1.msra.mxu0 0.0
    %1542 = vmatprep.subr.mxu0 0.0
    %1543 = vmatpush1.msra.mxu0 0.0
    %1544 = vmatprep.subr.mxu0 0.0
    %1545 = vmatpush1.msra.mxu0 0.0
    %1546 = vmatprep.subr.mxu0 0.0
    %1547 = vmatpush1.msra.mxu0 0.0
    %1548 = vmatprep.subr.mxu0 0.0
    %1549 = vmatpush1.msra.mxu0 0.0
    %1550 = vmatprep.subr.mxu0 0.0
    %1551 = vmatpush1.msra.mxu0 0.0
    %1552 = vmatprep.subr.mxu0 0.0
    %1553 = vmatpush1.msra.mxu0 0.0
    %1554 = vmatprep.subr.mxu0 0.0
    %1555 = vmatpush1.msra.mxu0 0.0
    %1556 = vmatprep.mubr.f32.mxu0 0.0
    %1557 = vmatmul.mubr.f32.gmra.mrb[0].mxu0 %v1491
    %v1558 = vpop.f32.mrb[0].mxu0
    %v1559 = vadd.f32 %v125, %v1558
    %v1560 = vpop.f32.mrb[0].mxu0
    %v1561 = vadd.f32 %v129, %v1560
    %1562 = vdwg.mxu0
    %v1563 = vxor.u32 %v1559, 2147483648
    %v1564 = vxor.u32 %v1561, 2147483648
    %v1565 = vmul.f32 %v1563, 1.442695
    %v1566 = vpow.pop %v1565
    %v1567 = vmul.f32 %v1564, 1.442695
    %v1568 = vpow.pop %v1567
    %v1569 = vadd.f32 %v1566, 1.0
    %v1570 = vadd.f32 %v1568, 1.0
    %v1571 = vrcp.pop %v1569
    %v1572 = vmul.f32 1.0, %v1571
    %v1573 = vrcp.pop %v1570
    %v1574 = vmul.f32 1.0, %v1573
    %v1575 = vtanh.pop %v1561
    %v1576 = vmul.f32 %v1572, %v1295
    %1578 = vrot.lane.b32.xlu0 %v1575, 64
    %v1579 = vpop.permute.xlu0 %1578
    %v1581 = vmul.f32 %v1572, %v1579
    %1583 = vrot.lane.b32.xlu0 %v1581, 64
    %v1584 = vpop.permute.xlu0 %1583
    %v1586 = vadd.f32 %v1576, %v1584
    %v1587 = vtanh.pop %v1586
    %1589 = vrot.lane.b32.xlu0 %v1587, 64
    %v1590 = vpop.permute.xlu0 %1589
    %v1592 = vmul.f32 %v1574, %v1590
    %v1593 = vld [vmem:[%s0 + $0x5] sm:$0x1]
    %v1594 = vld [vmem:[%s0 + $0xd] sm:$0x1]
    %v1596 = vsel %vm134, %v1486, 0
    %1598 = vmatprep.subr.mxu0 %v61
    %1599 = vmatpush1.msra.mxu0 %v60
    %1600 = vmatprep.subr.mxu0 %v63
    %1601 = vmatpush1.msra.mxu0 %v62
    %1602 = vmatprep.subr.mxu0 %v65
    %1603 = vmatpush1.msra.mxu0 %v64
    %1604 = vmatprep.subr.mxu0 %v67
    %1605 = vmatpush1.msra.mxu0 %v66
    %1606 = vmatprep.subr.mxu0 %v69
    %1607 = vmatpush1.msra.mxu0 %v68
    %1608 = vmatprep.subr.mxu0 %v71
    %1609 = vmatpush1.msra.mxu0 %v70
    %1610 = vmatprep.subr.mxu0 %v73
    %1611 = vmatpush1.msra.mxu0 %v72
    %1612 = vmatprep.subr.mxu0 %v75
    %1613 = vmatpush1.msra.mxu0 %v74
    %1614 = vmatprep.subr.mxu0 0.0
    %1615 = vmatpush1.msra.mxu0 0.0
    %1616 = vmatprep.subr.mxu0 0.0
    %1617 = vmatpush1.msra.mxu0 0.0
    %1618 = vmatprep.subr.mxu0 0.0
    %1619 = vmatpush1.msra.mxu0 0.0
    %1620 = vmatprep.subr.mxu0 0.0
    %1621 = vmatpush1.msra.mxu0 0.0
    %1622 = vmatprep.subr.mxu0 0.0
    %1623 = vmatpush1.msra.mxu0 0.0
    %1624 = vmatprep.subr.mxu0 0.0
    %1625 = vmatpush1.msra.mxu0 0.0
    %1626 = vmatprep.subr.mxu0 0.0
    %1627 = vmatpush1.msra.mxu0 0.0
    %1628 = vmatprep.subr.mxu0 0.0
    %1629 = vmatpush1.msra.mxu0 0.0
    %1630 = vmatprep.subr.mxu0 0.0
    %1631 = vmatpush1.msra.mxu0 0.0
    %1632 = vmatprep.subr.mxu0 0.0
    %1633 = vmatpush1.msra.mxu0 0.0
    %1634 = vmatprep.subr.mxu0 0.0
    %1635 = vmatpush1.msra.mxu0 0.0
    %1636 = vmatprep.subr.mxu0 0.0
    %1637 = vmatpush1.msra.mxu0 0.0
    %1638 = vmatprep.subr.mxu0 0.0
    %1639 = vmatpush1.msra.mxu0 0.0
    %1640 = vmatprep.subr.mxu0 0.0
    %1641 = vmatpush1.msra.mxu0 0.0
    %1642 = vmatprep.subr.mxu0 0.0
    %1643 = vmatpush1.msra.mxu0 0.0
    %1644 = vmatprep.subr.mxu0 0.0
    %1645 = vmatpush1.msra.mxu0 0.0
    %1646 = vmatprep.subr.mxu0 0.0
    %1647 = vmatpush1.msra.mxu0 0.0
    %1648 = vmatprep.subr.mxu0 0.0
    %1649 = vmatpush1.msra.mxu0 0.0
    %1650 = vmatprep.subr.mxu0 0.0
    %1651 = vmatpush1.msra.mxu0 0.0
    %1652 = vmatprep.subr.mxu0 0.0
    %1653 = vmatpush1.msra.mxu0 0.0
    %1654 = vmatprep.subr.mxu0 0.0
    %1655 = vmatpush1.msra.mxu0 0.0
    %1656 = vmatprep.subr.mxu0 0.0
    %1657 = vmatpush1.msra.mxu0 0.0
    %1658 = vmatprep.subr.mxu0 0.0
    %1659 = vmatpush1.msra.mxu0 0.0
    %1660 = vmatprep.subr.mxu0 0.0
    %1661 = vmatpush1.msra.mxu0 0.0
    %1662 = vmatprep.mubr.f32.mxu0 0.0
    %1663 = vmatmul.mubr.f32.gmra.mrb[0].mxu0 %v1596
    %v1664 = vpop.f32.mrb[0].mxu0
    %v1665 = vadd.f32 0.0, %v1664
    %v1666 = vpop.f32.mrb[0].mxu0
    %v1667 = vadd.f32 0.0, %v1666
    %1668 = vdwg.mxu0
    %v1671 = vrot.slane %v1594, 7
    %v1672 = vsel %vm212, %v1671, %v1593
    %v1673 = vsel %vm216, %v1672, 0
    %1675 = vmatprep.subr.mxu0 %v222
    %1676 = vmatpush1.msra.mxu0 %v220
    %1677 = vmatprep.subr.mxu0 0.0
    %1678 = vmatpush1.msra.mxu0 0.0
    %1679 = vmatprep.subr.mxu0 0.0
    %1680 = vmatpush1.msra.mxu0 0.0
    %1681 = vmatprep.subr.mxu0 0.0
    %1682 = vmatpush1.msra.mxu0 0.0
    %1683 = vmatprep.subr.mxu0 0.0
    %1684 = vmatpush1.msra.mxu0 0.0
    %1685 = vmatprep.subr.mxu0 0.0
    %1686 = vmatpush1.msra.mxu0 0.0
    %1687 = vmatprep.subr.mxu0 0.0
    %1688 = vmatpush1.msra.mxu0 0.0
    %1689 = vmatprep.subr.mxu0 0.0
    %1690 = vmatpush1.msra.mxu0 0.0
    %1691 = vmatprep.subr.mxu0 0.0
    %1692 = vmatpush1.msra.mxu0 0.0
    %1693 = vmatprep.subr.mxu0 0.0
    %1694 = vmatpush1.msra.mxu0 0.0
    %1695 = vmatprep.subr.mxu0 0.0
    %1696 = vmatpush1.msra.mxu0 0.0
    %1697 = vmatprep.subr.mxu0 0.0
    %1698 = vmatpush1.msra.mxu0 0.0
    %1699 = vmatprep.subr.mxu0 0.0
    %1700 = vmatpush1.msra.mxu0 0.0
    %1701 = vmatprep.subr.mxu0 0.0
    %1702 = vmatpush1.msra.mxu0 0.0
    %1703 = vmatprep.subr.mxu0 0.0
    %1704 = vmatpush1.msra.mxu0 0.0
    %1705 = vmatprep.subr.mxu0 0.0
    %1706 = vmatpush1.msra.mxu0 0.0
    %1707 = vmatprep.subr.mxu0 0.0
    %1708 = vmatpush1.msra.mxu0 0.0
    %1709 = vmatprep.subr.mxu0 0.0
    %1710 = vmatpush1.msra.mxu0 0.0
    %1711 = vmatprep.subr.mxu0 0.0
    %1712 = vmatpush1.msra.mxu0 0.0
    %1713 = vmatprep.subr.mxu0 0.0
    %1714 = vmatpush1.msra.mxu0 0.0
    %1715 = vmatprep.subr.mxu0 0.0
    %1716 = vmatpush1.msra.mxu0 0.0
    %1717 = vmatprep.subr.mxu0 0.0
    %1718 = vmatpush1.msra.mxu0 0.0
    %1719 = vmatprep.subr.mxu0 0.0
    %1720 = vmatpush1.msra.mxu0 0.0
    %1721 = vmatprep.subr.mxu0 0.0
    %1722 = vmatpush1.msra.mxu0 0.0
    %1723 = vmatprep.subr.mxu0 0.0
    %1724 = vmatpush1.msra.mxu0 0.0
    %1725 = vmatprep.subr.mxu0 0.0
    %1726 = vmatpush1.msra.mxu0 0.0
    %1727 = vmatprep.subr.mxu0 0.0
    %1728 = vmatpush1.msra.mxu0 0.0
    %1729 = vmatprep.subr.mxu0 0.0
    %1730 = vmatpush1.msra.mxu0 0.0
    %1731 = vmatprep.subr.mxu0 0.0
    %1732 = vmatpush1.msra.mxu0 0.0
    %1733 = vmatprep.subr.mxu0 0.0
    %1734 = vmatpush1.msra.mxu0 0.0
    %1735 = vmatprep.subr.mxu0 0.0
    %1736 = vmatpush1.msra.mxu0 0.0
    %1737 = vmatprep.subr.mxu0 0.0
    %1738 = vmatpush1.msra.mxu0 0.0
    %1739 = vmatprep.mubr.f32.mxu0 0.0
    %1740 = vmatmul.mubr.f32.gmra.mrb[0].mxu0 %v1673
    %v1741 = vpop.f32.mrb[0].mxu0
    %v1742 = vadd.f32 %v1665, %v1741
    %v1743 = vpop.f32.mrb[0].mxu0
    %v1744 = vadd.f32 %v1667, %v1743
    %1745 = vdwg.mxu0
    %v1746 = vadd.f32 %v1742, %v113
    %v1747 = vadd.f32 %v1744, %v117
    %v1748 = vxor.u32 %v1746, 2147483648
    %v1749 = vxor.u32 %v1747, 2147483648
    %v1750 = vmul.f32 %v1748, 1.442695
    %v1751 = vpow.pop %v1750
    %v1752 = vmul.f32 %v1749, 1.442695
    %v1753 = vpow.pop %v1752
    %v1754 = vadd.f32 %v1751, 1.0
    %v1755 = vadd.f32 %v1753, 1.0
    %v1756 = vrcp.pop %v1754
    %v1757 = vmul.f32 1.0, %v1756
    %v1758 = vrcp.pop %v1755
    %v1759 = vmul.f32 1.0, %v1758
    %v1760 = vtanh.pop %v1747
    %v1761 = vmul.f32 %v1757, %v1480
    %1763 = vrot.lane.b32.xlu0 %v1760, 64
    %v1764 = vpop.permute.xlu0 %1763
    %v1766 = vmul.f32 %v1757, %v1764
    %1768 = vrot.lane.b32.xlu0 %v1766, 64
    %v1769 = vpop.permute.xlu0 %1768
    %v1771 = vadd.f32 %v1761, %v1769
    %v1772 = vtanh.pop %v1771
    %1774 = vrot.lane.b32.xlu0 %v1772, 64
    %v1775 = vpop.permute.xlu0 %1774
    %v1777 = vmul.f32 %v1759, %v1775
    %1779 = vrot.lane.b32.xlu0 %v1592, 64
    %v1780 = vpop.permute.xlu0 %1779
    %v1782 = vsel %vm134, %v1777, %v1780
    %1783 = vmatprep.subr.mxu0 %v77
    %1784 = vmatpush1.msra.mxu0 %v76
    %1785 = vmatprep.subr.mxu0 %v79
    %1786 = vmatpush1.msra.mxu0 %v78
    %1787 = vmatprep.subr.mxu0 %v81
    %1788 = vmatpush1.msra.mxu0 %v80
    %1789 = vmatprep.subr.mxu0 %v83
    %1790 = vmatpush1.msra.mxu0 %v82
    %1791 = vmatprep.subr.mxu0 %v85
    %1792 = vmatpush1.msra.mxu0 %v84
    %1793 = vmatprep.subr.mxu0 %v87
    %1794 = vmatpush1.msra.mxu0 %v86
    %1795 = vmatprep.subr.mxu0 %v89
    %1796 = vmatpush1.msra.mxu0 %v88
    %1797 = vmatprep.subr.mxu0 %v91
    %1798 = vmatpush1.msra.mxu0 %v90
    %1799 = vmatprep.subr.mxu0 %v93
    %1800 = vmatpush1.msra.mxu0 %v92
    %1801 = vmatprep.subr.mxu0 %v95
    %1802 = vmatpush1.msra.mxu0 %v94
    %1803 = vmatprep.subr.mxu0 %v97
    %1804 = vmatpush1.msra.mxu0 %v96
    %1805 = vmatprep.subr.mxu0 %v99
    %1806 = vmatpush1.msra.mxu0 %v98
    %1807 = vmatprep.subr.mxu0 %v101
    %1808 = vmatpush1.msra.mxu0 %v100
    %1809 = vmatprep.subr.mxu0 %v103
    %1810 = vmatpush1.msra.mxu0 %v102
    %1811 = vmatprep.subr.mxu0 %v105
    %1812 = vmatpush1.msra.mxu0 %v104
    %1813 = vmatprep.subr.mxu0 %v107
    %1814 = vmatpush1.msra.mxu0 %v106
    %1815 = vmatprep.subr.mxu0 0.0
    %1816 = vmatpush1.msra.mxu0 0.0
    %1817 = vmatprep.subr.mxu0 0.0
    %1818 = vmatpush1.msra.mxu0 0.0
    %1819 = vmatprep.subr.mxu0 0.0
    %1820 = vmatpush1.msra.mxu0 0.0
    %1821 = vmatprep.subr.mxu0 0.0
    %1822 = vmatpush1.msra.mxu0 0.0
    %1823 = vmatprep.subr.mxu0 0.0
    %1824 = vmatpush1.msra.mxu0 0.0
    %1825 = vmatprep.subr.mxu0 0.0
    %1826 = vmatpush1.msra.mxu0 0.0
    %1827 = vmatprep.subr.mxu0 0.0
    %1828 = vmatpush1.msra.mxu0 0.0
    %1829 = vmatprep.subr.mxu0 0.0
    %1830 = vmatpush1.msra.mxu0 0.0
    %1831 = vmatprep.subr.mxu0 0.0
    %1832 = vmatpush1.msra.mxu0 0.0
    %1833 = vmatprep.subr.mxu0 0.0
    %1834 = vmatpush1.msra.mxu0 0.0
    %1835 = vmatprep.subr.mxu0 0.0
    %1836 = vmatpush1.msra.mxu0 0.0
    %1837 = vmatprep.subr.mxu0 0.0
    %1838 = vmatpush1.msra.mxu0 0.0
    %1839 = vmatprep.subr.mxu0 0.0
    %1840 = vmatpush1.msra.mxu0 0.0
    %1841 = vmatprep.subr.mxu0 0.0
    %1842 = vmatpush1.msra.mxu0 0.0
    %1843 = vmatprep.subr.mxu0 0.0
    %1844 = vmatpush1.msra.mxu0 0.0
    %1845 = vmatprep.subr.mxu0 0.0
    %1846 = vmatpush1.msra.mxu0 0.0
    %1847 = vmatprep.mubr.f32.mxu0 0.0
    %1848 = vmatmul.mubr.f32.gmra.mrb[0].mxu0 %v1782
    %v1849 = vpop.f32.mrb[0].mxu0
    %v1850 = vadd.f32 %v125, %v1849
    %v1851 = vpop.f32.mrb[0].mxu0
    %v1852 = vadd.f32 %v129, %v1851
    %1853 = vdwg.mxu0
    %v1854 = vxor.u32 %v1850, 2147483648
    %v1855 = vxor.u32 %v1852, 2147483648
    %v1856 = vmul.f32 %v1854, 1.442695
    %v1857 = vpow.pop %v1856
    %v1858 = vmul.f32 %v1855, 1.442695
    %v1859 = vpow.pop %v1858
    %v1860 = vadd.f32 %v1857, 1.0
    %v1861 = vadd.f32 %v1859, 1.0
    %v1862 = vrcp.pop %v1860
    %v1863 = vmul.f32 1.0, %v1862
    %v1864 = vrcp.pop %v1861
    %v1865 = vmul.f32 1.0, %v1864
    %v1866 = vtanh.pop %v1852
    %v1867 = vmul.f32 %v1863, %v1586
    %1869 = vrot.lane.b32.xlu0 %v1866, 64
    %v1870 = vpop.permute.xlu0 %1869
    %v1872 = vmul.f32 %v1863, %v1870
    %1874 = vrot.lane.b32.xlu0 %v1872, 64
    %v1875 = vpop.permute.xlu0 %1874
    %v1877 = vadd.f32 %v1867, %v1875
    %v1878 = vtanh.pop %v1877
    %1880 = vrot.lane.b32.xlu0 %v1878, 64
    %v1881 = vpop.permute.xlu0 %1880
    %v1883 = vmul.f32 %v1865, %v1881
    %v1884 = vld [vmem:[%s0 + $0x6] sm:$0x1]
    %v1885 = vld [vmem:[%s0 + $0xe] sm:$0x1]
    %v1887 = vsel %vm134, %v1777, 0
    %1889 = vmatprep.subr.mxu0 %v61
    %1890 = vmatpush1.msra.mxu0 %v60
    %1891 = vmatprep.subr.mxu0 %v63
    %1892 = vmatpush1.msra.mxu0 %v62
    %1893 = vmatprep.subr.mxu0 %v65
    %1894 = vmatpush1.msra.mxu0 %v64
    %1895 = vmatprep.subr.mxu0 %v67
    %1896 = vmatpush1.msra.mxu0 %v66
    %1897 = vmatprep.subr.mxu0 %v69
    %1898 = vmatpush1.msra.mxu0 %v68
    %1899 = vmatprep.subr.mxu0 %v71
    %1900 = vmatpush1.msra.mxu0 %v70
    %1901 = vmatprep.subr.mxu0 %v73
    %1902 = vmatpush1.msra.mxu0 %v72
    %1903 = vmatprep.subr.mxu0 %v75
    %1904 = vmatpush1.msra.mxu0 %v74
    %1905 = vmatprep.subr.mxu0 0.0
    %1906 = vmatpush1.msra.mxu0 0.0
    %1907 = vmatprep.subr.mxu0 0.0
    %1908 = vmatpush1.msra.mxu0 0.0
    %1909 = vmatprep.subr.mxu0 0.0
    %1910 = vmatpush1.msra.mxu0 0.0
    %1911 = vmatprep.subr.mxu0 0.0
    %1912 = vmatpush1.msra.mxu0 0.0
    %1913 = vmatprep.subr.mxu0 0.0
    %1914 = vmatpush1.msra.mxu0 0.0
    %1915 = vmatprep.subr.mxu0 0.0
    %1916 = vmatpush1.msra.mxu0 0.0
    %1917 = vmatprep.subr.mxu0 0.0
    %1918 = vmatpush1.msra.mxu0 0.0
    %1919 = vmatprep.subr.mxu0 0.0
    %1920 = vmatpush1.msra.mxu0 0.0
    %1921 = vmatprep.subr.mxu0 0.0
    %1922 = vmatpush1.msra.mxu0 0.0
    %1923 = vmatprep.subr.mxu0 0.0
    %1924 = vmatpush1.msra.mxu0 0.0
    %1925 = vmatprep.subr.mxu0 0.0
    %1926 = vmatpush1.msra.mxu0 0.0
    %1927 = vmatprep.subr.mxu0 0.0
    %1928 = vmatpush1.msra.mxu0 0.0
    %1929 = vmatprep.subr.mxu0 0.0
    %1930 = vmatpush1.msra.mxu0 0.0
    %1931 = vmatprep.subr.mxu0 0.0
    %1932 = vmatpush1.msra.mxu0 0.0
    %1933 = vmatprep.subr.mxu0 0.0
    %1934 = vmatpush1.msra.mxu0 0.0
    %1935 = vmatprep.subr.mxu0 0.0
    %1936 = vmatpush1.msra.mxu0 0.0
    %1937 = vmatprep.subr.mxu0 0.0
    %1938 = vmatpush1.msra.mxu0 0.0
    %1939 = vmatprep.subr.mxu0 0.0
    %1940 = vmatpush1.msra.mxu0 0.0
    %1941 = vmatprep.subr.mxu0 0.0
    %1942 = vmatpush1.msra.mxu0 0.0
    %1943 = vmatprep.subr.mxu0 0.0
    %1944 = vmatpush1.msra.mxu0 0.0
    %1945 = vmatprep.subr.mxu0 0.0
    %1946 = vmatpush1.msra.mxu0 0.0
    %1947 = vmatprep.subr.mxu0 0.0
    %1948 = vmatpush1.msra.mxu0 0.0
    %1949 = vmatprep.subr.mxu0 0.0
    %1950 = vmatpush1.msra.mxu0 0.0
    %1951 = vmatprep.subr.mxu0 0.0
    %1952 = vmatpush1.msra.mxu0 0.0
    %1953 = vmatprep.mubr.f32.mxu0 0.0
    %1954 = vmatmul.mubr.f32.gmra.mrb[0].mxu0 %v1887
    %v1955 = vpop.f32.mrb[0].mxu0
    %v1956 = vadd.f32 0.0, %v1955
    %v1957 = vpop.f32.mrb[0].mxu0
    %v1958 = vadd.f32 0.0, %v1957
    %1959 = vdwg.mxu0
    %v1962 = vrot.slane %v1885, 7
    %v1963 = vsel %vm212, %v1962, %v1884
    %v1964 = vsel %vm216, %v1963, 0
    %1966 = vmatprep.subr.mxu0 %v222
    %1967 = vmatpush1.msra.mxu0 %v220
    %1968 = vmatprep.subr.mxu0 0.0
    %1969 = vmatpush1.msra.mxu0 0.0
    %1970 = vmatprep.subr.mxu0 0.0
    %1971 = vmatpush1.msra.mxu0 0.0
    %1972 = vmatprep.subr.mxu0 0.0
    %1973 = vmatpush1.msra.mxu0 0.0
    %1974 = vmatprep.subr.mxu0 0.0
    %1975 = vmatpush1.msra.mxu0 0.0
    %1976 = vmatprep.subr.mxu0 0.0
    %1977 = vmatpush1.msra.mxu0 0.0
    %1978 = vmatprep.subr.mxu0 0.0
    %1979 = vmatpush1.msra.mxu0 0.0
    %1980 = vmatprep.subr.mxu0 0.0
    %1981 = vmatpush1.msra.mxu0 0.0
    %1982 = vmatprep.subr.mxu0 0.0
    %1983 = vmatpush1.msra.mxu0 0.0
    %1984 = vmatprep.subr.mxu0 0.0
    %1985 = vmatpush1.msra.mxu0 0.0
    %1986 = vmatprep.subr.mxu0 0.0
    %1987 = vmatpush1.msra.mxu0 0.0
    %1988 = vmatprep.subr.mxu0 0.0
    %1989 = vmatpush1.msra.mxu0 0.0
    %1990 = vmatprep.subr.mxu0 0.0
    %1991 = vmatpush1.msra.mxu0 0.0
    %1992 = vmatprep.subr.mxu0 0.0
    %1993 = vmatpush1.msra.mxu0 0.0
    %1994 = vmatprep.subr.mxu0 0.0
    %1995 = vmatpush1.msra.mxu0 0.0
    %1996 = vmatprep.subr.mxu0 0.0
    %1997 = vmatpush1.msra.mxu0 0.0
    %1998 = vmatprep.subr.mxu0 0.0
    %1999 = vmatpush1.msra.mxu0 0.0
    %2000 = vmatprep.subr.mxu0 0.0
    %2001 = vmatpush1.msra.mxu0 0.0
    %2002 = vmatprep.subr.mxu0 0.0
    %2003 = vmatpush1.msra.mxu0 0.0
    %2004 = vmatprep.subr.mxu0 0.0
    %2005 = vmatpush1.msra.mxu0 0.0
    %2006 = vmatprep.subr.mxu0 0.0
    %2007 = vmatpush1.msra.mxu0 0.0
    %2008 = vmatprep.subr.mxu0 0.0
    %2009 = vmatpush1.msra.mxu0 0.0
    %2010 = vmatprep.subr.mxu0 0.0
    %2011 = vmatpush1.msra.mxu0 0.0
    %2012 = vmatprep.subr.mxu0 0.0
    %2013 = vmatpush1.msra.mxu0 0.0
    %2014 = vmatprep.subr.mxu0 0.0
    %2015 = vmatpush1.msra.mxu0 0.0
    %2016 = vmatprep.subr.mxu0 0.0
    %2017 = vmatpush1.msra.mxu0 0.0
    %2018 = vmatprep.subr.mxu0 0.0
    %2019 = vmatpush1.msra.mxu0 0.0
    %2020 = vmatprep.subr.mxu0 0.0
    %2021 = vmatpush1.msra.mxu0 0.0
    %2022 = vmatprep.subr.mxu0 0.0
    %2023 = vmatpush1.msra.mxu0 0.0
    %2024 = vmatprep.subr.mxu0 0.0
    %2025 = vmatpush1.msra.mxu0 0.0
    %2026 = vmatprep.subr.mxu0 0.0
    %2027 = vmatpush1.msra.mxu0 0.0
    %2028 = vmatprep.subr.mxu0 0.0
    %2029 = vmatpush1.msra.mxu0 0.0
    %2030 = vmatprep.mubr.f32.mxu0 0.0
    %2031 = vmatmul.mubr.f32.gmra.mrb[0].mxu0 %v1964
    %v2032 = vpop.f32.mrb[0].mxu0
    %v2033 = vadd.f32 %v1956, %v2032
    %v2034 = vpop.f32.mrb[0].mxu0
    %v2035 = vadd.f32 %v1958, %v2034
    %2036 = vdwg.mxu0
    %v2037 = vadd.f32 %v2033, %v113
    %v2038 = vadd.f32 %v2035, %v117
    %v2039 = vxor.u32 %v2037, 2147483648
    %v2040 = vxor.u32 %v2038, 2147483648
    %v2041 = vmul.f32 %v2039, 1.442695
    %v2042 = vpow.pop %v2041
    %v2043 = vmul.f32 %v2040, 1.442695
    %v2044 = vpow.pop %v2043
    %v2045 = vadd.f32 %v2042, 1.0
    %v2046 = vadd.f32 %v2044, 1.0
    %v2047 = vrcp.pop %v2045
    %v2048 = vmul.f32 1.0, %v2047
    %v2049 = vrcp.pop %v2046
    %v2050 = vmul.f32 1.0, %v2049
    %v2051 = vtanh.pop %v2038
    %v2052 = vmul.f32 %v2048, %v1771
    %2054 = vrot.lane.b32.xlu0 %v2051, 64
    %v2055 = vpop.permute.xlu0 %2054
    %v2057 = vmul.f32 %v2048, %v2055
    %2059 = vrot.lane.b32.xlu0 %v2057, 64
    %v2060 = vpop.permute.xlu0 %2059
    %v2062 = vadd.f32 %v2052, %v2060
    %v2063 = vtanh.pop %v2062
    %2065 = vrot.lane.b32.xlu0 %v2063, 64
    %v2066 = vpop.permute.xlu0 %2065
    %v2068 = vmul.f32 %v2050, %v2066
    %2070 = vrot.lane.b32.xlu0 %v1883, 64
    %v2071 = vpop.permute.xlu0 %2070
    %v2073 = vsel %vm134, %v2068, %v2071
    %2074 = vmatprep.subr.mxu0 %v77
    %2075 = vmatpush1.msra.mxu0 %v76
    %2076 = vmatprep.subr.mxu0 %v79
    %2077 = vmatpush1.msra.mxu0 %v78
    %2078 = vmatprep.subr.mxu0 %v81
    %2079 = vmatpush1.msra.mxu0 %v80
    %2080 = vmatprep.subr.mxu0 %v83
    %2081 = vmatpush1.msra.mxu0 %v82
    %2082 = vmatprep.subr.mxu0 %v85
    %2083 = vmatpush1.msra.mxu0 %v84
    %2084 = vmatprep.subr.mxu0 %v87
    %2085 = vmatpush1.msra.mxu0 %v86
    %2086 = vmatprep.subr.mxu0 %v89
    %2087 = vmatpush1.msra.mxu0 %v88
    %2088 = vmatprep.subr.mxu0 %v91
    %2089 = vmatpush1.msra.mxu0 %v90
    %2090 = vmatprep.subr.mxu0 %v93
    %2091 = vmatpush1.msra.mxu0 %v92
    %2092 = vmatprep.subr.mxu0 %v95
    %2093 = vmatpush1.msra.mxu0 %v94
    %2094 = vmatprep.subr.mxu0 %v97
    %2095 = vmatpush1.msra.mxu0 %v96
    %2096 = vmatprep.subr.mxu0 %v99
    %2097 = vmatpush1.msra.mxu0 %v98
    %2098 = vmatprep.subr.mxu0 %v101
    %2099 = vmatpush1.msra.mxu0 %v100
    %2100 = vmatprep.subr.mxu0 %v103
    %2101 = vmatpush1.msra.mxu0 %v102
    %2102 = vmatprep.subr.mxu0 %v105
    %2103 = vmatpush1.msra.mxu0 %v104
    %2104 = vmatprep.subr.mxu0 %v107
    %2105 = vmatpush1.msra.mxu0 %v106
    %2106 = vmatprep.subr.mxu0 0.0
    %2107 = vmatpush1.msra.mxu0 0.0
    %2108 = vmatprep.subr.mxu0 0.0
    %2109 = vmatpush1.msra.mxu0 0.0
    %2110 = vmatprep.subr.mxu0 0.0
    %2111 = vmatpush1.msra.mxu0 0.0
    %2112 = vmatprep.subr.mxu0 0.0
    %2113 = vmatpush1.msra.mxu0 0.0
    %2114 = vmatprep.subr.mxu0 0.0
    %2115 = vmatpush1.msra.mxu0 0.0
    %2116 = vmatprep.subr.mxu0 0.0
    %2117 = vmatpush1.msra.mxu0 0.0
    %2118 = vmatprep.subr.mxu0 0.0
    %2119 = vmatpush1.msra.mxu0 0.0
    %2120 = vmatprep.subr.mxu0 0.0
    %2121 = vmatpush1.msra.mxu0 0.0
    %2122 = vmatprep.subr.mxu0 0.0
    %2123 = vmatpush1.msra.mxu0 0.0
    %2124 = vmatprep.subr.mxu0 0.0
    %2125 = vmatpush1.msra.mxu0 0.0
    %2126 = vmatprep.subr.mxu0 0.0
    %2127 = vmatpush1.msra.mxu0 0.0
    %2128 = vmatprep.subr.mxu0 0.0
    %2129 = vmatpush1.msra.mxu0 0.0
    %2130 = vmatprep.subr.mxu0 0.0
    %2131 = vmatpush1.msra.mxu0 0.0
    %2132 = vmatprep.subr.mxu0 0.0
    %2133 = vmatpush1.msra.mxu0 0.0
    %2134 = vmatprep.subr.mxu0 0.0
    %2135 = vmatpush1.msra.mxu0 0.0
    %2136 = vmatprep.subr.mxu0 0.0
    %2137 = vmatpush1.msra.mxu0 0.0
    %2138 = vmatprep.mubr.f32.mxu0 0.0
    %2139 = vmatmul.mubr.f32.gmra.mrb[0].mxu0 %v2073
    %v2140 = vpop.f32.mrb[0].mxu0
    %v2141 = vadd.f32 %v125, %v2140
    %v2142 = vpop.f32.mrb[0].mxu0
    %v2143 = vadd.f32 %v129, %v2142
    %2144 = vdwg.mxu0
    %v2145 = vxor.u32 %v2141, 2147483648
    %v2146 = vxor.u32 %v2143, 2147483648
    %v2147 = vmul.f32 %v2145, 1.442695
    %v2148 = vpow.pop %v2147
    %v2149 = vmul.f32 %v2146, 1.442695
    %v2150 = vpow.pop %v2149
    %v2151 = vadd.f32 %v2148, 1.0
    %v2152 = vadd.f32 %v2150, 1.0
    %v2153 = vrcp.pop %v2151
    %v2154 = vmul.f32 1.0, %v2153
    %v2155 = vrcp.pop %v2152
    %v2156 = vmul.f32 1.0, %v2155
    %v2157 = vtanh.pop %v2143
    %v2158 = vmul.f32 %v2154, %v1877
    %2160 = vrot.lane.b32.xlu0 %v2157, 64
    %v2161 = vpop.permute.xlu0 %2160
    %v2163 = vmul.f32 %v2154, %v2161
    %2165 = vrot.lane.b32.xlu0 %v2163, 64
    %v2166 = vpop.permute.xlu0 %2165
    %v2168 = vadd.f32 %v2158, %v2166
    %v2169 = vtanh.pop %v2168
    %2171 = vrot.lane.b32.xlu0 %v2169, 64
    %v2172 = vpop.permute.xlu0 %2171
    %v2174 = vmul.f32 %v2156, %v2172
    %v2175 = vld [vmem:[%s0 + $0x7] sm:$0x1]
    %v2176 = vld [vmem:[%s0 + $0xf] sm:$0x1]
    %v2178 = vsel %vm134, %v2068, 0
    %2180 = vmatprep.subr.mxu0 %v61
    %2181 = vmatpush1.msra.mxu0 %v60
    %2182 = vmatprep.subr.mxu0 %v63
    %2183 = vmatpush1.msra.mxu0 %v62
    %2184 = vmatprep.subr.mxu0 %v65
    %2185 = vmatpush1.msra.mxu0 %v64
    %2186 = vmatprep.subr.mxu0 %v67
    %2187 = vmatpush1.msra.mxu0 %v66
    %2188 = vmatprep.subr.mxu0 %v69
    %2189 = vmatpush1.msra.mxu0 %v68
    %2190 = vmatprep.subr.mxu0 %v71
    %2191 = vmatpush1.msra.mxu0 %v70
    %2192 = vmatprep.subr.mxu0 %v73
    %2193 = vmatpush1.msra.mxu0 %v72
    %2194 = vmatprep.subr.mxu0 %v75
    %2195 = vmatpush1.msra.mxu0 %v74
    %2196 = vmatprep.subr.mxu0 0.0
    %2197 = vmatpush1.msra.mxu0 0.0
    %2198 = vmatprep.subr.mxu0 0.0
    %2199 = vmatpush1.msra.mxu0 0.0
    %2200 = vmatprep.subr.mxu0 0.0
    %2201 = vmatpush1.msra.mxu0 0.0
    %2202 = vmatprep.subr.mxu0 0.0
    %2203 = vmatpush1.msra.mxu0 0.0
    %2204 = vmatprep.subr.mxu0 0.0
    %2205 = vmatpush1.msra.mxu0 0.0
    %2206 = vmatprep.subr.mxu0 0.0
    %2207 = vmatpush1.msra.mxu0 0.0
    %2208 = vmatprep.subr.mxu0 0.0
    %2209 = vmatpush1.msra.mxu0 0.0
    %2210 = vmatprep.subr.mxu0 0.0
    %2211 = vmatpush1.msra.mxu0 0.0
    %2212 = vmatprep.subr.mxu0 0.0
    %2213 = vmatpush1.msra.mxu0 0.0
    %2214 = vmatprep.subr.mxu0 0.0
    %2215 = vmatpush1.msra.mxu0 0.0
    %2216 = vmatprep.subr.mxu0 0.0
    %2217 = vmatpush1.msra.mxu0 0.0
    %2218 = vmatprep.subr.mxu0 0.0
    %2219 = vmatpush1.msra.mxu0 0.0
    %2220 = vmatprep.subr.mxu0 0.0
    %2221 = vmatpush1.msra.mxu0 0.0
    %2222 = vmatprep.subr.mxu0 0.0
    %2223 = vmatpush1.msra.mxu0 0.0
    %2224 = vmatprep.subr.mxu0 0.0
    %2225 = vmatpush1.msra.mxu0 0.0
    %2226 = vmatprep.subr.mxu0 0.0
    %2227 = vmatpush1.msra.mxu0 0.0
    %2228 = vmatprep.subr.mxu0 0.0
    %2229 = vmatpush1.msra.mxu0 0.0
    %2230 = vmatprep.subr.mxu0 0.0
    %2231 = vmatpush1.msra.mxu0 0.0
    %2232 = vmatprep.subr.mxu0 0.0
    %2233 = vmatpush1.msra.mxu0 0.0
    %2234 = vmatprep.subr.mxu0 0.0
    %2235 = vmatpush1.msra.mxu0 0.0
    %2236 = vmatprep.subr.mxu0 0.0
    %2237 = vmatpush1.msra.mxu0 0.0
    %2238 = vmatprep.subr.mxu0 0.0
    %2239 = vmatpush1.msra.mxu0 0.0
    %2240 = vmatprep.subr.mxu0 0.0
    %2241 = vmatpush1.msra.mxu0 0.0
    %2242 = vmatprep.subr.mxu0 0.0
    %2243 = vmatpush1.msra.mxu0 0.0
    %2244 = vmatprep.mubr.f32.mxu0 0.0
    %2245 = vmatmul.mubr.f32.gmra.mrb[0].mxu0 %v2178
    %v2246 = vpop.f32.mrb[0].mxu0
    %v2247 = vadd.f32 0.0, %v2246
    %v2248 = vpop.f32.mrb[0].mxu0
    %v2249 = vadd.f32 0.0, %v2248
    %2250 = vdwg.mxu0
    %v2253 = vrot.slane %v2176, 7
    %v2254 = vsel %vm212, %v2253, %v2175
    %v2255 = vsel %vm216, %v2254, 0
    %2257 = vmatprep.subr.mxu0 %v222
    %2258 = vmatpush1.msra.mxu0 %v220
    %2259 = vmatprep.subr.mxu0 0.0
    %2260 = vmatpush1.msra.mxu0 0.0
    %2261 = vmatprep.subr.mxu0 0.0
    %2262 = vmatpush1.msra.mxu0 0.0
    %2263 = vmatprep.subr.mxu0 0.0
    %2264 = vmatpush1.msra.mxu0 0.0
    %2265 = vmatprep.subr.mxu0 0.0
    %2266 = vmatpush1.msra.mxu0 0.0
    %2267 = vmatprep.subr.mxu0 0.0
    %2268 = vmatpush1.msra.mxu0 0.0
    %2269 = vmatprep.subr.mxu0 0.0
    %2270 = vmatpush1.msra.mxu0 0.0
    %2271 = vmatprep.subr.mxu0 0.0
    %2272 = vmatpush1.msra.mxu0 0.0
    %2273 = vmatprep.subr.mxu0 0.0
    %2274 = vmatpush1.msra.mxu0 0.0
    %2275 = vmatprep.subr.mxu0 0.0
    %2276 = vmatpush1.msra.mxu0 0.0
    %2277 = vmatprep.subr.mxu0 0.0
    %2278 = vmatpush1.msra.mxu0 0.0
    %2279 = vmatprep.subr.mxu0 0.0
    %2280 = vmatpush1.msra.mxu0 0.0
    %2281 = vmatprep.subr.mxu0 0.0
    %2282 = vmatpush1.msra.mxu0 0.0
    %2283 = vmatprep.subr.mxu0 0.0
    %2284 = vmatpush1.msra.mxu0 0.0
    %2285 = vmatprep.subr.mxu0 0.0
    %2286 = vmatpush1.msra.mxu0 0.0
    %2287 = vmatprep.subr.mxu0 0.0
    %2288 = vmatpush1.msra.mxu0 0.0
    %2289 = vmatprep.subr.mxu0 0.0
    %2290 = vmatpush1.msra.mxu0 0.0
    %2291 = vmatprep.subr.mxu0 0.0
    %2292 = vmatpush1.msra.mxu0 0.0
    %2293 = vmatprep.subr.mxu0 0.0
    %2294 = vmatpush1.msra.mxu0 0.0
    %2295 = vmatprep.subr.mxu0 0.0
    %2296 = vmatpush1.msra.mxu0 0.0
    %2297 = vmatprep.subr.mxu0 0.0
    %2298 = vmatpush1.msra.mxu0 0.0
    %2299 = vmatprep.subr.mxu0 0.0
    %2300 = vmatpush1.msra.mxu0 0.0
    %2301 = vmatprep.subr.mxu0 0.0
    %2302 = vmatpush1.msra.mxu0 0.0
    %2303 = vmatprep.subr.mxu0 0.0
    %2304 = vmatpush1.msra.mxu0 0.0
    %2305 = vmatprep.subr.mxu0 0.0
    %2306 = vmatpush1.msra.mxu0 0.0
    %2307 = vmatprep.subr.mxu0 0.0
    %2308 = vmatpush1.msra.mxu0 0.0
    %2309 = vmatprep.subr.mxu0 0.0
    %2310 = vmatpush1.msra.mxu0 0.0
    %2311 = vmatprep.subr.mxu0 0.0
    %2312 = vmatpush1.msra.mxu0 0.0
    %2313 = vmatprep.subr.mxu0 0.0
    %2314 = vmatpush1.msra.mxu0 0.0
    %2315 = vmatprep.subr.mxu0 0.0
    %2316 = vmatpush1.msra.mxu0 0.0
    %2317 = vmatprep.subr.mxu0 0.0
    %2318 = vmatpush1.msra.mxu0 0.0
    %2319 = vmatprep.subr.mxu0 0.0
    %2320 = vmatpush1.msra.mxu0 0.0
    %2321 = vmatprep.mubr.f32.mxu0 0.0
    %2322 = vmatmul.mubr.f32.gmra.mrb[0].mxu0 %v2255
    %v2323 = vpop.f32.mrb[0].mxu0
    %v2324 = vadd.f32 %v2247, %v2323
    %v2325 = vpop.f32.mrb[0].mxu0
    %v2326 = vadd.f32 %v2249, %v2325
    %2327 = vdwg.mxu0
    %v2328 = vadd.f32 %v2324, %v113
    %v2329 = vadd.f32 %v2326, %v117
    %v2330 = vxor.u32 %v2328, 2147483648
    %v2331 = vxor.u32 %v2329, 2147483648
    %v2332 = vmul.f32 %v2330, 1.442695
    %v2333 = vpow.pop %v2332
    %v2334 = vmul.f32 %v2331, 1.442695
    %v2335 = vpow.pop %v2334
    %v2336 = vadd.f32 %v2333, 1.0
    %v2337 = vadd.f32 %v2335, 1.0
    %v2338 = vrcp.pop %v2336
    %v2339 = vmul.f32 1.0, %v2338
    %v2340 = vrcp.pop %v2337
    %v2341 = vmul.f32 1.0, %v2340
    %v2342 = vtanh.pop %v2329
    %v2343 = vmul.f32 %v2339, %v2062
    %2345 = vrot.lane.b32.xlu0 %v2342, 64
    %v2346 = vpop.permute.xlu0 %2345
    %v2348 = vmul.f32 %v2339, %v2346
    %2350 = vrot.lane.b32.xlu0 %v2348, 64
    %v2351 = vpop.permute.xlu0 %2350
    %v2353 = vadd.f32 %v2343, %v2351
    %v2354 = vtanh.pop %v2353
    %2356 = vrot.lane.b32.xlu0 %v2354, 64
    %v2357 = vpop.permute.xlu0 %2356
    %v2359 = vmul.f32 %v2341, %v2357
    %2361 = vrot.lane.b32.xlu0 %v2174, 64
    %v2362 = vpop.permute.xlu0 %2361
    %v2364 = vsel %vm134, %v2359, %v2362
    %2365 = vmatprep.subr.mxu0 %v77
    %2366 = vmatpush1.msra.mxu0 %v76
    %2367 = vmatprep.subr.mxu0 %v79
    %2368 = vmatpush1.msra.mxu0 %v78
    %2369 = vmatprep.subr.mxu0 %v81
    %2370 = vmatpush1.msra.mxu0 %v80
    %2371 = vmatprep.subr.mxu0 %v83
    %2372 = vmatpush1.msra.mxu0 %v82
    %2373 = vmatprep.subr.mxu0 %v85
    %2374 = vmatpush1.msra.mxu0 %v84
    %2375 = vmatprep.subr.mxu0 %v87
    %2376 = vmatpush1.msra.mxu0 %v86
    %2377 = vmatprep.subr.mxu0 %v89
    %2378 = vmatpush1.msra.mxu0 %v88
    %2379 = vmatprep.subr.mxu0 %v91
    %2380 = vmatpush1.msra.mxu0 %v90
    %2381 = vmatprep.subr.mxu0 %v93
    %2382 = vmatpush1.msra.mxu0 %v92
    %2383 = vmatprep.subr.mxu0 %v95
    %2384 = vmatpush1.msra.mxu0 %v94
    %2385 = vmatprep.subr.mxu0 %v97
    %2386 = vmatpush1.msra.mxu0 %v96
    %2387 = vmatprep.subr.mxu0 %v99
    %2388 = vmatpush1.msra.mxu0 %v98
    %2389 = vmatprep.subr.mxu0 %v101
    %2390 = vmatpush1.msra.mxu0 %v100
    %2391 = vmatprep.subr.mxu0 %v103
    %2392 = vmatpush1.msra.mxu0 %v102
    %2393 = vmatprep.subr.mxu0 %v105
    %2394 = vmatpush1.msra.mxu0 %v104
    %2395 = vmatprep.subr.mxu0 %v107
    %2396 = vmatpush1.msra.mxu0 %v106
    %2397 = vmatprep.subr.mxu0 0.0
    %2398 = vmatpush1.msra.mxu0 0.0
    %2399 = vmatprep.subr.mxu0 0.0
    %2400 = vmatpush1.msra.mxu0 0.0
    %2401 = vmatprep.subr.mxu0 0.0
    %2402 = vmatpush1.msra.mxu0 0.0
    %2403 = vmatprep.subr.mxu0 0.0
    %2404 = vmatpush1.msra.mxu0 0.0
    %2405 = vmatprep.subr.mxu0 0.0
    %2406 = vmatpush1.msra.mxu0 0.0
    %2407 = vmatprep.subr.mxu0 0.0
    %2408 = vmatpush1.msra.mxu0 0.0
    %2409 = vmatprep.subr.mxu0 0.0
    %2410 = vmatpush1.msra.mxu0 0.0
    %2411 = vmatprep.subr.mxu0 0.0
    %2412 = vmatpush1.msra.mxu0 0.0
    %2413 = vmatprep.subr.mxu0 0.0
    %2414 = vmatpush1.msra.mxu0 0.0
    %2415 = vmatprep.subr.mxu0 0.0
    %2416 = vmatpush1.msra.mxu0 0.0
    %2417 = vmatprep.subr.mxu0 0.0
    %2418 = vmatpush1.msra.mxu0 0.0
    %2419 = vmatprep.subr.mxu0 0.0
    %2420 = vmatpush1.msra.mxu0 0.0
    %2421 = vmatprep.subr.mxu0 0.0
    %2422 = vmatpush1.msra.mxu0 0.0
    %2423 = vmatprep.subr.mxu0 0.0
    %2424 = vmatpush1.msra.mxu0 0.0
    %2425 = vmatprep.subr.mxu0 0.0
    %2426 = vmatpush1.msra.mxu0 0.0
    %2427 = vmatprep.subr.mxu0 0.0
    %2428 = vmatpush1.msra.mxu0 0.0
    %2429 = vmatprep.mubr.f32.mxu0 0.0
    %2430 = vmatmul.mubr.f32.gmra.mrb[0].mxu0 %v2364
    %v2431 = vpop.f32.mrb[0].mxu0
    %v2432 = vadd.f32 %v125, %v2431
    %v2433 = vpop.f32.mrb[0].mxu0
    %v2434 = vadd.f32 %v129, %v2433
    %2435 = vdwg.mxu0
    %v2436 = vxor.u32 %v2432, 2147483648
    %v2437 = vxor.u32 %v2434, 2147483648
    %v2438 = vmul.f32 %v2436, 1.442695
    %v2439 = vpow.pop %v2438
    %v2440 = vmul.f32 %v2437, 1.442695
    %v2441 = vpow.pop %v2440
    %v2442 = vadd.f32 %v2439, 1.0
    %v2443 = vadd.f32 %v2441, 1.0
    %v2444 = vrcp.pop %v2442
    %v2445 = vmul.f32 1.0, %v2444
    %v2446 = vrcp.pop %v2443
    %v2447 = vmul.f32 1.0, %v2446
    %v2448 = vtanh.pop %v2434
    %v2449 = vmul.f32 %v2445, %v2168
    %2451 = vrot.lane.b32.xlu0 %v2448, 64
    %v2452 = vpop.permute.xlu0 %2451
    %v2454 = vmul.f32 %v2445, %v2452
    %2456 = vrot.lane.b32.xlu0 %v2454, 64
    %v2457 = vpop.permute.xlu0 %2456
    %v2459 = vadd.f32 %v2449, %v2457
    %v2460 = vtanh.pop %v2459
    %2462 = vrot.lane.b32.xlu0 %v2460, 64
    %v2463 = vpop.permute.xlu0 %2462
    %v2465 = vmul.f32 %v2447, %v2463
    %v2466 = vld [vmem:[%s6] sm:$0xff]
    %v2467 = vld [vmem:[%s6 + $0x8] sm:$0xff]
    %v2468 = vld [vmem:[%s6 + $0x10] sm:$0xff]
    %v2469 = vld [vmem:[%s6 + $0x18] sm:$0xff]
    %v2470 = vld [vmem:[%s6 + $0x20] sm:$0xff]
    %v2471 = vld [vmem:[%s6 + $0x28] sm:$0xff]
    %v2472 = vld [vmem:[%s6 + $0x30] sm:$0xff]
    %v2473 = vld [vmem:[%s6 + $0x38] sm:$0xff]
    %v2474 = vld [vmem:[#allocation2] sm:$0x1]
    %v2476 = vlaneseq
    %v2477 = vshrl.u32 %v2476, 7
    %v2478 = vsub.s32 0, %v2477
    %v2479 = vrot.slane %v2474, %v2478
    %v2482 = vsel %vm134, %v2465, 0
    %2484 = vmatprep.subr.mxu0 0.0
    %2485 = vmatpush1.msra.mxu0 %v2466
    %2486 = vmatprep.subr.mxu0 0.0
    %2487 = vmatpush1.msra.mxu0 %v2467
    %2488 = vmatprep.subr.mxu0 0.0
    %2489 = vmatpush1.msra.mxu0 %v2468
    %2490 = vmatprep.subr.mxu0 0.0
    %2491 = vmatpush1.msra.mxu0 %v2469
    %2492 = vmatprep.subr.mxu0 0.0
    %2493 = vmatpush1.msra.mxu0 %v2470
    %2494 = vmatprep.subr.mxu0 0.0
    %2495 = vmatpush1.msra.mxu0 %v2471
    %2496 = vmatprep.subr.mxu0 0.0
    %2497 = vmatpush1.msra.mxu0 %v2472
    %2498 = vmatprep.subr.mxu0 0.0
    %2499 = vmatpush1.msra.mxu0 %v2473
    %2500 = vmatprep.subr.mxu0 0.0
    %2501 = vmatpush1.msra.mxu0 0.0
    %2502 = vmatprep.subr.mxu0 0.0
    %2503 = vmatpush1.msra.mxu0 0.0
    %2504 = vmatprep.subr.mxu0 0.0
    %2505 = vmatpush1.msra.mxu0 0.0
    %2506 = vmatprep.subr.mxu0 0.0
    %2507 = vmatpush1.msra.mxu0 0.0
    %2508 = vmatprep.subr.mxu0 0.0
    %2509 = vmatpush1.msra.mxu0 0.0
    %2510 = vmatprep.subr.mxu0 0.0
    %2511 = vmatpush1.msra.mxu0 0.0
    %2512 = vmatprep.subr.mxu0 0.0
    %2513 = vmatpush1.msra.mxu0 0.0
    %2514 = vmatprep.subr.mxu0 0.0
    %2515 = vmatpush1.msra.mxu0 0.0
    %2516 = vmatprep.subr.mxu0 0.0
    %2517 = vmatpush1.msra.mxu0 0.0
    %2518 = vmatprep.subr.mxu0 0.0
    %2519 = vmatpush1.msra.mxu0 0.0
    %2520 = vmatprep.subr.mxu0 0.0
    %2521 = vmatpush1.msra.mxu0 0.0
    %2522 = vmatprep.subr.mxu0 0.0
    %2523 = vmatpush1.msra.mxu0 0.0
    %2524 = vmatprep.subr.mxu0 0.0
    %2525 = vmatpush1.msra.mxu0 0.0
    %2526 = vmatprep.subr.mxu0 0.0
    %2527 = vmatpush1.msra.mxu0 0.0
    %2528 = vmatprep.subr.mxu0 0.0
    %2529 = vmatpush1.msra.mxu0 0.0
    %2530 = vmatprep.subr.mxu0 0.0
    %2531 = vmatpush1.msra.mxu0 0.0
    %2532 = vmatprep.subr.mxu0 0.0
    %2533 = vmatpush1.msra.mxu0 0.0
    %2534 = vmatprep.subr.mxu0 0.0
    %2535 = vmatpush1.msra.mxu0 0.0
    %2536 = vmatprep.subr.mxu0 0.0
    %2537 = vmatpush1.msra.mxu0 0.0
    %2538 = vmatprep.subr.mxu0 0.0
    %2539 = vmatpush1.msra.mxu0 0.0
    %2540 = vmatprep.subr.mxu0 0.0
    %2541 = vmatpush1.msra.mxu0 0.0
    %2542 = vmatprep.subr.mxu0 0.0
    %2543 = vmatpush1.msra.mxu0 0.0
    %2544 = vmatprep.subr.mxu0 0.0
    %2545 = vmatpush1.msra.mxu0 0.0
    %2546 = vmatprep.subr.mxu0 0.0
    %2547 = vmatpush1.msra.mxu0 0.0
    %2548 = vmatprep.mubr.f32.mxu0 0.0
    %2549 = vmatmul.mubr.f32.gmra.mrb[0].mxu0 %v2482
    %v2550 = vpop.f32.mrb[0].mxu0
    %v2551 = vadd.f32 %v2479, %v2550
    %v2552 = vpop.f32.mrb[0].mxu0
    %2553 = vdwg.mxu0
    %vm2554 = vcmask 1024
    %2555 = vst.msk [vmem:[%s8] sm:$0x3] %vm2554, %v2551
    // Predicated region
    $region42: #{lstm_model_forward.1} parent=1 // pred_check
      _
    $region43: #{lstm_model_forward.1} parent=1 // pred_check_branch
      %2557 = sbr.rel (0) target = $region45
    $region44: #{lstm_model_forward.1} parent=1 // pred_region
      _
    $region45: #{lstm_model_forward.1} parent=1 // pred_fallthru
      _
    // Predicated region
    $region46: #{lstm_model_forward.1} parent=1 // pred_check
      _
    $region47: #{lstm_model_forward.1} parent=1 // pred_check_branch
      %2559 = sbr.rel (0) target = $region49
    $region48: #{lstm_model_forward.1} parent=1 // pred_region
      _
    $region49: #{lstm_model_forward.1} parent=1 // pred_fallthru
      _
    %2560 = vsyncpa [#allocation4], 1
    %2561 = vsyncpa [#allocation6], 1

</llo_original>
